<compile_context>
chip_gen: v7x
topology: tpu7x:2x2x1
jax: 0.10.0
libtpu: 0.0.40
codegen_flags: <defaults>
</compile_context>

<pallas_src>
import jax
import jax.numpy as jnp
from jax.experimental import pallas as pl
from jax.experimental.pallas import tpu as pltpu

# ----------------------------- configuration -------------------------------
PATCH = 4                       # patch-embed "conv" kernel/stride
IN_CH = 3                       # RGB input
STEM_C = 64                     # stem channels
EMB_DIM = 512                   # img_embedding dim (MultiTaskModel input_dim)
HID = 256                       # classifier_hidden_dim
NUM_TASKS = 13                  # num_tasks (num_classes=1 -> scalar per head)
PATCH_DIM = IN_CH * PATCH * PATCH   # 48
K_PAD = 64                      # patch dim padded (col 48 = ones for bias fold)
OUT_PAD = 128                   # lane-dense padded output width
HEAD_W = NUM_TASKS * HID        # 3328 fused head-1 width


# ------------------------------ Pallas kernel ------------------------------
def biovil_kernel(patches_ref, wp_ref, wfused_ref, aux_ref, out_ref):
    b = out_ref.shape[0]
    n = patches_ref.shape[0]
    p = n // b

    # ---- stem "conv" as one MXU matmul; bias folded via ones column (48) ---
    feat = jnp.dot(patches_ref[...], wp_ref[...],
                   preferred_element_type=jnp.float32)
    feat = jnp.maximum(feat, 0.0)                            # (B*P, 64) f32

    # ---- global average pool per image (f32 sublane reduce, no pool DMA) ---
    pooled = jnp.mean(feat.reshape(b, p, STEM_C), axis=1)    # (B, 64) f32

    # ---- fused 512-d projection + layer 1 of all 13 heads ------------------
    bfused = aux_ref[0:1, :]                                 # (1, 3328) f32
    h = jnp.dot(pooled.astype(jnp.bfloat16), wfused_ref[...],
                preferred_element_type=jnp.float32) + bfused
    h = jnp.maximum(h, 0.0)                                  # (B, 3328)

    # ---- layer 2 of all heads: dense w2 row (VPU) + per-task lane reduces --
    w2row = aux_ref[1:2, :]                                  # (1, 3328) f32
    b2row = aux_ref[2:3, 0:OUT_PAD]                          # (1, 128)  f32
    prod = h * w2row                                         # (B, 3328)

    # lane-dense (B, 128) output; cols >= 13 stay zero (b2row is zero there)
    out_ref[...] = jnp.broadcast_to(b2row, (b, OUT_PAD))
    for t in range(NUM_TASKS):
        seg = prod[:, t * HID:(t + 1) * HID]                 # (B, 256) aligned
        out_ref[:, t:t + 1] = (jnp.sum(seg, axis=-1, keepdims=True)
                               + b2row[:, t:t + 1])


# ------------------------------- JAX wrapper --------------------------------
def patchify(x):
    """NCHW image -> (B*num_patches, PATCH_DIM) flat patches."""
    b, c, h, w = x.shape
    nh, nw = h // PATCH, w // PATCH
    x = jnp.transpose(x, (0, 2, 3, 1))                       # NHWC
    x = x.reshape(b, nh, PATCH, nw, PATCH, c)
    x = jnp.transpose(x, (0, 1, 3, 2, 4, 5))                 # (B,nh,nw,ph,pw,C)
    return x.reshape(b * nh * nw, PATCH * PATCH * c)         # (B*P, 48)


@jax.jit
def biovil_v2_forward(x, kernel_params):
    wp_pad, wfused, aux = kernel_params
    b = x.shape[0]

    flat = patchify(x.astype(jnp.float32))                   # (B*P, 48)
    npatch = flat.shape[0]
    ones = jnp.ones((npatch, 1), jnp.float32)                # bias-fold column
    pad = jnp.zeros((npatch, K_PAD - PATCH_DIM - 1), jnp.float32)
    patches = jnp.concatenate([flat, ones, pad], axis=1).astype(jnp.bfloat16)

    operands = (patches, wp_pad, wfused, aux)
    flops = (2 * npatch * K_PAD * STEM_C                     # stem matmul
             + npatch * STEM_C                               # pooling adds
             + 2 * b * K_PAD * HEAD_W                        # fused head-1
             + 3 * b * HEAD_W)                               # head-2 mul+reduce
    bytes_accessed = (sum(int(a.size) * a.dtype.itemsize for a in operands)
                      + b * OUT_PAD * 4)

    vmem = pltpu.MemorySpace.VMEM
    out = pl.pallas_call(
        biovil_kernel,
        out_shape=jax.ShapeDtypeStruct((b, OUT_PAD), jnp.float32),
        in_specs=[pl.BlockSpec(memory_space=vmem) for _ in operands],
        out_specs=pl.BlockSpec(memory_space=vmem),
        cost_estimate=pl.CostEstimate(flops=flops, transcendentals=0,
                                      bytes_accessed=bytes_accessed),
    )(*operands)
    return out[:, :NUM_TASKS]                                # (B, 13)


# ---------------------- raw params + offline weight packing -----------------
def init_raw_params(key):
    ks = jax.random.split(key, 8)
    s = 0.02
    wp = jax.random.normal(ks[0], (PATCH_DIM, STEM_C), jnp.float32) * s
    bp = jax.random.normal(ks[1], (STEM_C,), jnp.float32) * s
    wproj = jax.random.normal(ks[2], (STEM_C, EMB_DIM), jnp.float32) * s
    bproj = jax.random.normal(ks[3], (EMB_DIM,), jnp.float32) * s
    w1 = jax.random.normal(ks[4], (NUM_TASKS, EMB_DIM, HID), jnp.float32) * s
    b1 = jax.random.normal(ks[5], (NUM_TASKS, HID), jnp.float32) * s
    w2 = jax.random.normal(ks[6], (NUM_TASKS, HID), jnp.float32) * s
    b2 = jax.random.normal(ks[7], (NUM_TASKS,), jnp.float32) * s
    return wp, bp, wproj, bproj, w1, b1, w2, b2


def pack_kernel_params(raw_params):
    wp, bp, wproj, bproj, w1, b1, w2, b2 = raw_params

    # Stem weights: zero-pad K 48 -> 64, fold bias into row 48 (ones column).
    wp_pad = jnp.zeros((K_PAD, STEM_C), jnp.float32)
    wp_pad = wp_pad.at[:PATCH_DIM, :].set(wp)
    wp_pad = wp_pad.at[PATCH_DIM, :].set(bp)
    wp_pad = wp_pad.astype(jnp.bfloat16)

    # Fuse the 512-d projection into head layer 1 (no nonlinearity between):
    # product computed in f32, single cast to bf16 at the end.
    w1flat = jnp.transpose(w1, (1, 0, 2)).reshape(EMB_DIM, HEAD_W)  # (512, 3328)
    b1flat = b1.reshape(HEAD_W)
    wfused = (wproj @ w1flat).astype(jnp.bfloat16)                  # (64, 3328)
    bfused = bproj @ w1flat + b1flat                                # (3328,) f32

    # One tile-aligned f32 aux slab for every remaining small tensor.
    aux = jnp.zeros((8, HEAD_W), jnp.float32)
    aux = aux.at[0, :].set(bfused)                                  # fused bias
    aux = aux.at[1, :].set(w2.reshape(HEAD_W))                      # dense w2 row
    aux = aux.at[2, :NUM_TASKS].set(b2)                             # head-2 bias
    return wp_pad, wfused, aux


# ----------------------------- pure-JAX reference ---------------------------
def reference_forward(x, raw_params):
    """f32 reference from RAW per-task weights (per-task loop, no fusion)."""
    wp, bp, wproj, bproj, w1, b1, w2, b2 = raw_params
    b = x.shape[0]
    p = (x.shape[2] // PATCH) * (x.shape[3] // PATCH)
    flat = patchify(x.astype(jnp.float32))                          # (B*P, 48)
    feat = jnp.maximum(flat @ wp + bp, 0.0)                         # (B*P, 64)
    pooled = feat.reshape(b, p, STEM_C).mean(axis=1)                # (B, 64)
    emb = pooled @ wproj + bproj                                    # (B, 512)
    outs = []
    for t in range(NUM_TASKS):
        h = jnp.maximum(emb @ w1[t] + b1[t], 0.0)                   # (B, 256)
        outs.append(h @ w2[t] + b2[t])                              # (B,)
    return jnp.stack(outs, axis=1)                                  # (B, 13)


# --------------------------------- main -------------------------------------
if __name__ == "__main__":
    key = jax.random.PRNGKey(0)
    kx, kp = jax.random.split(key)
    x = jax.random.normal(kx, (2, IN_CH, 16, 16), jnp.float32)   # NCHW like PyTorch
    raw_params = init_raw_params(kp)
    kernel_params = pack_kernel_params(raw_params)

    out = jax.block_until_ready(biovil_v2_forward(x, kernel_params))
    ref = reference_forward(x, raw_params)

    assert out.shape == (2, NUM_TASKS), out.shape
    assert jnp.allclose(out, ref, rtol=2e-2, atol=2e-3), "mismatch vs raw-weight reference"

    print("KERNEL_OK")
</pallas_src>

<mosaic_0001>
module attributes {stable_mosaic.version = 11 : i64} {
  func.func @biovil_kernel(%arg0: memref<32x64xbf16, #tpu.memory_space<vmem>>, %arg1: memref<64x64xbf16, #tpu.memory_space<vmem>>, %arg2: memref<64x3328xbf16, #tpu.memory_space<vmem>>, %arg3: memref<8x3328xf32, #tpu.memory_space<vmem>>, %arg4: memref<2x128xf32, #tpu.memory_space<vmem>>) attributes {dimension_semantics = [], scalar_prefetch = 0 : i64, scratch_operands = 0 : i64, tpu.core_type = #tpu.core_type<tc>} {
    %c0 = arith.constant 0 : index
    %c0_0 = arith.constant 0 : index
    %0 = vector.load %arg0[%c0, %c0_0] : memref<32x64xbf16, #tpu.memory_space<vmem>>, vector<32x64xbf16>
    %c0_1 = arith.constant 0 : index
    %c0_2 = arith.constant 0 : index
    %1 = vector.load %arg1[%c0_1, %c0_2] : memref<64x64xbf16, #tpu.memory_space<vmem>>, vector<64x64xbf16>
    %cst = arith.constant dense<0.000000e+00> : vector<32x64xf32>
    %2 = tpu.matmul %0, %1, %cst {dimension_numbers = #tpu.dot_dimension_numbers<[1], [0], [0], [1], [0, 0, 1, 1], [], []>} : vector<32x64xbf16>, vector<64x64xbf16>, vector<32x64xf32> -> vector<32x64xf32>
    %cst_3 = arith.constant 0.000000e+00 : f32
    %3 = vector.broadcast %cst_3 : f32 to vector<32x64xf32>
    %4 = arith.maximumf %2, %3 : vector<32x64xf32>
    %5 = vector.shape_cast %4 : vector<32x64xf32> to vector<2x16x64xf32>
    %cst_4 = arith.constant dense<0.000000e+00> : vector<2x64xf32>
    %6 = vector.multi_reduction <add>, %5, %cst_4 [1] : vector<2x16x64xf32> to vector<2x64xf32>
    %cst_5 = arith.constant 1.600000e+01 : f32
    %7 = vector.broadcast %cst_5 : f32 to vector<2x64xf32>
    %8 = arith.divf %6, %7 : vector<2x64xf32>
    %c0_6 = arith.constant 0 : index
    %c0_7 = arith.constant 0 : index
    %9 = vector.load %arg3[%c0_6, %c0_7] : memref<8x3328xf32, #tpu.memory_space<vmem>>, vector<1x3328xf32>
    %10 = arith.truncf %8 : vector<2x64xf32> to vector<2x64xbf16>
    %c0_8 = arith.constant 0 : index
    %c0_9 = arith.constant 0 : index
    %11 = vector.load %arg2[%c0_8, %c0_9] : memref<64x3328xbf16, #tpu.memory_space<vmem>>, vector<64x3328xbf16>
    %cst_10 = arith.constant dense<0.000000e+00> : vector<2x3328xf32>
    %12 = tpu.matmul %10, %11, %cst_10 {dimension_numbers = #tpu.dot_dimension_numbers<[1], [0], [0], [1], [0, 0, 1, 1], [], []>} : vector<2x64xbf16>, vector<64x3328xbf16>, vector<2x3328xf32> -> vector<2x3328xf32>
    %13 = vector.broadcast %9 : vector<1x3328xf32> to vector<2x3328xf32>
    %14 = arith.addf %12, %13 : vector<2x3328xf32>
    %cst_11 = arith.constant 0.000000e+00 : f32
    %15 = vector.broadcast %cst_11 : f32 to vector<2x3328xf32>
    %16 = arith.maximumf %14, %15 : vector<2x3328xf32>
    %c1 = arith.constant 1 : index
    %c0_12 = arith.constant 0 : index
    %17 = vector.load %arg3[%c1, %c0_12] : memref<8x3328xf32, #tpu.memory_space<vmem>>, vector<1x3328xf32>
    %c2 = arith.constant 2 : index
    %c0_13 = arith.constant 0 : index
    %18 = vector.load %arg3[%c2, %c0_13] : memref<8x3328xf32, #tpu.memory_space<vmem>>, vector<1x128xf32>
    %19 = vector.broadcast %17 : vector<1x3328xf32> to vector<2x3328xf32>
    %20 = arith.mulf %16, %19 : vector<2x3328xf32>
    %21 = vector.shape_cast %18 : vector<1x128xf32> to vector<1x128xf32>
    %22 = vector.broadcast %21 : vector<1x128xf32> to vector<2x128xf32>
    %c0_14 = arith.constant 0 : index
    %c0_15 = arith.constant 0 : index
    %23 = vector.load %arg4[%c0_14, %c0_15] : memref<2x128xf32, #tpu.memory_space<vmem>>, vector<2x128xf32>
    tpu.vector_store %arg4[%c0_14, %c0_15], %22 {strides = array<i32>} : memref<2x128xf32, #tpu.memory_space<vmem>>, vector<2x128xf32>,
    %24 = vector.extract_strided_slice %20 {offsets = [0, 0], sizes = [2, 256], strides = [1, 1]} : vector<2x3328xf32> to vector<2x256xf32>
    %cst_16 = arith.constant dense<0.000000e+00> : vector<2xf32>
    %25 = vector.multi_reduction <add>, %24, %cst_16 [1] : vector<2x256xf32> to vector<2xf32>
    %26 = vector.shape_cast %25 : vector<2xf32> to vector<2x1xf32>
    %27 = vector.extract_strided_slice %18 {offsets = [0, 0], sizes = [1, 1], strides = [1, 1]} : vector<1x128xf32> to vector<1x1xf32>
    %28 = vector.broadcast %27 : vector<1x1xf32> to vector<2x1xf32>
    %29 = arith.addf %26, %28 : vector<2x1xf32>
    %c0_17 = arith.constant 0 : index
    %c0_18 = arith.constant 0 : index
    %30 = vector.load %arg4[%c0_17, %c0_18] : memref<2x128xf32, #tpu.memory_space<vmem>>, vector<2x1xf32>
    tpu.vector_store %arg4[%c0_17, %c0_18], %29 {strides = array<i32>} : memref<2x128xf32, #tpu.memory_space<vmem>>, vector<2x1xf32>,
    %31 = vector.extract_strided_slice %20 {offsets = [0, 256], sizes = [2, 256], strides = [1, 1]} : vector<2x3328xf32> to vector<2x256xf32>
    %cst_19 = arith.constant dense<0.000000e+00> : vector<2xf32>
    %32 = vector.multi_reduction <add>, %31, %cst_19 [1] : vector<2x256xf32> to vector<2xf32>
    %33 = vector.shape_cast %32 : vector<2xf32> to vector<2x1xf32>
    %34 = vector.extract_strided_slice %18 {offsets = [0, 1], sizes = [1, 1], strides = [1, 1]} : vector<1x128xf32> to vector<1x1xf32>
    %35 = vector.broadcast %34 : vector<1x1xf32> to vector<2x1xf32>
    %36 = arith.addf %33, %35 : vector<2x1xf32>
    %c0_20 = arith.constant 0 : index
    %c1_21 = arith.constant 1 : index
    %37 = vector.load %arg4[%c0_20, %c1_21] : memref<2x128xf32, #tpu.memory_space<vmem>>, vector<2x1xf32>
    tpu.vector_store %arg4[%c0_20, %c1_21], %36 {strides = array<i32>} : memref<2x128xf32, #tpu.memory_space<vmem>>, vector<2x1xf32>,
    %38 = vector.extract_strided_slice %20 {offsets = [0, 512], sizes = [2, 256], strides = [1, 1]} : vector<2x3328xf32> to vector<2x256xf32>
    %cst_22 = arith.constant dense<0.000000e+00> : vector<2xf32>
    %39 = vector.multi_reduction <add>, %38, %cst_22 [1] : vector<2x256xf32> to vector<2xf32>
    %40 = vector.shape_cast %39 : vector<2xf32> to vector<2x1xf32>
    %41 = vector.extract_strided_slice %18 {offsets = [0, 2], sizes = [1, 1], strides = [1, 1]} : vector<1x128xf32> to vector<1x1xf32>
    %42 = vector.broadcast %41 : vector<1x1xf32> to vector<2x1xf32>
    %43 = arith.addf %40, %42 : vector<2x1xf32>
    %c0_23 = arith.constant 0 : index
    %c2_24 = arith.constant 2 : index
    %44 = vector.load %arg4[%c0_23, %c2_24] : memref<2x128xf32, #tpu.memory_space<vmem>>, vector<2x1xf32>
    tpu.vector_store %arg4[%c0_23, %c2_24], %43 {strides = array<i32>} : memref<2x128xf32, #tpu.memory_space<vmem>>, vector<2x1xf32>,
    %45 = vector.extract_strided_slice %20 {offsets = [0, 768], sizes = [2, 256], strides = [1, 1]} : vector<2x3328xf32> to vector<2x256xf32>
    %cst_25 = arith.constant dense<0.000000e+00> : vector<2xf32>
    %46 = vector.multi_reduction <add>, %45, %cst_25 [1] : vector<2x256xf32> to vector<2xf32>
    %47 = vector.shape_cast %46 : vector<2xf32> to vector<2x1xf32>
    %48 = vector.extract_strided_slice %18 {offsets = [0, 3], sizes = [1, 1], strides = [1, 1]} : vector<1x128xf32> to vector<1x1xf32>
    %49 = vector.broadcast %48 : vector<1x1xf32> to vector<2x1xf32>
    %50 = arith.addf %47, %49 : vector<2x1xf32>
    %c0_26 = arith.constant 0 : index
    %c3 = arith.constant 3 : index
    %51 = vector.load %arg4[%c0_26, %c3] : memref<2x128xf32, #tpu.memory_space<vmem>>, vector<2x1xf32>
    tpu.vector_store %arg4[%c0_26, %c3], %50 {strides = array<i32>} : memref<2x128xf32, #tpu.memory_space<vmem>>, vector<2x1xf32>,
    %52 = vector.extract_strided_slice %20 {offsets = [0, 1024], sizes = [2, 256], strides = [1, 1]} : vector<2x3328xf32> to vector<2x256xf32>
    %cst_27 = arith.constant dense<0.000000e+00> : vector<2xf32>
    %53 = vector.multi_reduction <add>, %52, %cst_27 [1] : vector<2x256xf32> to vector<2xf32>
    %54 = vector.shape_cast %53 : vector<2xf32> to vector<2x1xf32>
    %55 = vector.extract_strided_slice %18 {offsets = [0, 4], sizes = [1, 1], strides = [1, 1]} : vector<1x128xf32> to vector<1x1xf32>
    %56 = vector.broadcast %55 : vector<1x1xf32> to vector<2x1xf32>
    %57 = arith.addf %54, %56 : vector<2x1xf32>
    %c0_28 = arith.constant 0 : index
    %c4 = arith.constant 4 : index
    %58 = vector.load %arg4[%c0_28, %c4] : memref<2x128xf32, #tpu.memory_space<vmem>>, vector<2x1xf32>
    tpu.vector_store %arg4[%c0_28, %c4], %57 {strides = array<i32>} : memref<2x128xf32, #tpu.memory_space<vmem>>, vector<2x1xf32>,
    %59 = vector.extract_strided_slice %20 {offsets = [0, 1280], sizes = [2, 256], strides = [1, 1]} : vector<2x3328xf32> to vector<2x256xf32>
    %cst_29 = arith.constant dense<0.000000e+00> : vector<2xf32>
    %60 = vector.multi_reduction <add>, %59, %cst_29 [1] : vector<2x256xf32> to vector<2xf32>
    %61 = vector.shape_cast %60 : vector<2xf32> to vector<2x1xf32>
    %62 = vector.extract_strided_slice %18 {offsets = [0, 5], sizes = [1, 1], strides = [1, 1]} : vector<1x128xf32> to vector<1x1xf32>
    %63 = vector.broadcast %62 : vector<1x1xf32> to vector<2x1xf32>
    %64 = arith.addf %61, %63 : vector<2x1xf32>
    %c0_30 = arith.constant 0 : index
    %c5 = arith.constant 5 : index
    %65 = vector.load %arg4[%c0_30, %c5] : memref<2x128xf32, #tpu.memory_space<vmem>>, vector<2x1xf32>
    tpu.vector_store %arg4[%c0_30, %c5], %64 {strides = array<i32>} : memref<2x128xf32, #tpu.memory_space<vmem>>, vector<2x1xf32>,
    %66 = vector.extract_strided_slice %20 {offsets = [0, 1536], sizes = [2, 256], strides = [1, 1]} : vector<2x3328xf32> to vector<2x256xf32>
    %cst_31 = arith.constant dense<0.000000e+00> : vector<2xf32>
    %67 = vector.multi_reduction <add>, %66, %cst_31 [1] : vector<2x256xf32> to vector<2xf32>
    %68 = vector.shape_cast %67 : vector<2xf32> to vector<2x1xf32>
    %69 = vector.extract_strided_slice %18 {offsets = [0, 6], sizes = [1, 1], strides = [1, 1]} : vector<1x128xf32> to vector<1x1xf32>
    %70 = vector.broadcast %69 : vector<1x1xf32> to vector<2x1xf32>
    %71 = arith.addf %68, %70 : vector<2x1xf32>
    %c0_32 = arith.constant 0 : index
    %c6 = arith.constant 6 : index
    %72 = vector.load %arg4[%c0_32, %c6] : memref<2x128xf32, #tpu.memory_space<vmem>>, vector<2x1xf32>
    tpu.vector_store %arg4[%c0_32, %c6], %71 {strides = array<i32>} : memref<2x128xf32, #tpu.memory_space<vmem>>, vector<2x1xf32>,
    %73 = vector.extract_strided_slice %20 {offsets = [0, 1792], sizes = [2, 256], strides = [1, 1]} : vector<2x3328xf32> to vector<2x256xf32>
    %cst_33 = arith.constant dense<0.000000e+00> : vector<2xf32>
    %74 = vector.multi_reduction <add>, %73, %cst_33 [1] : vector<2x256xf32> to vector<2xf32>
    %75 = vector.shape_cast %74 : vector<2xf32> to vector<2x1xf32>
    %76 = vector.extract_strided_slice %18 {offsets = [0, 7], sizes = [1, 1], strides = [1, 1]} : vector<1x128xf32> to vector<1x1xf32>
    %77 = vector.broadcast %76 : vector<1x1xf32> to vector<2x1xf32>
    %78 = arith.addf %75, %77 : vector<2x1xf32>
    %c0_34 = arith.constant 0 : index
    %c7 = arith.constant 7 : index
    %79 = vector.load %arg4[%c0_34, %c7] : memref<2x128xf32, #tpu.memory_space<vmem>>, vector<2x1xf32>
    tpu.vector_store %arg4[%c0_34, %c7], %78 {strides = array<i32>} : memref<2x128xf32, #tpu.memory_space<vmem>>, vector<2x1xf32>,
    %80 = vector.extract_strided_slice %20 {offsets = [0, 2048], sizes = [2, 256], strides = [1, 1]} : vector<2x3328xf32> to vector<2x256xf32>
    %cst_35 = arith.constant dense<0.000000e+00> : vector<2xf32>
    %81 = vector.multi_reduction <add>, %80, %cst_35 [1] : vector<2x256xf32> to vector<2xf32>
    %82 = vector.shape_cast %81 : vector<2xf32> to vector<2x1xf32>
    %83 = vector.extract_strided_slice %18 {offsets = [0, 8], sizes = [1, 1], strides = [1, 1]} : vector<1x128xf32> to vector<1x1xf32>
    %84 = vector.broadcast %83 : vector<1x1xf32> to vector<2x1xf32>
    %85 = arith.addf %82, %84 : vector<2x1xf32>
    %c0_36 = arith.constant 0 : index
    %c8 = arith.constant 8 : index
    %86 = vector.load %arg4[%c0_36, %c8] : memref<2x128xf32, #tpu.memory_space<vmem>>, vector<2x1xf32>
    tpu.vector_store %arg4[%c0_36, %c8], %85 {strides = array<i32>} : memref<2x128xf32, #tpu.memory_space<vmem>>, vector<2x1xf32>,
    %87 = vector.extract_strided_slice %20 {offsets = [0, 2304], sizes = [2, 256], strides = [1, 1]} : vector<2x3328xf32> to vector<2x256xf32>
    %cst_37 = arith.constant dense<0.000000e+00> : vector<2xf32>
    %88 = vector.multi_reduction <add>, %87, %cst_37 [1] : vector<2x256xf32> to vector<2xf32>
    %89 = vector.shape_cast %88 : vector<2xf32> to vector<2x1xf32>
    %90 = vector.extract_strided_slice %18 {offsets = [0, 9], sizes = [1, 1], strides = [1, 1]} : vector<1x128xf32> to vector<1x1xf32>
    %91 = vector.broadcast %90 : vector<1x1xf32> to vector<2x1xf32>
    %92 = arith.addf %89, %91 : vector<2x1xf32>
    %c0_38 = arith.constant 0 : index
    %c9 = arith.constant 9 : index
    %93 = vector.load %arg4[%c0_38, %c9] : memref<2x128xf32, #tpu.memory_space<vmem>>, vector<2x1xf32>
    tpu.vector_store %arg4[%c0_38, %c9], %92 {strides = array<i32>} : memref<2x128xf32, #tpu.memory_space<vmem>>, vector<2x1xf32>,
    %94 = vector.extract_strided_slice %20 {offsets = [0, 2560], sizes = [2, 256], strides = [1, 1]} : vector<2x3328xf32> to vector<2x256xf32>
    %cst_39 = arith.constant dense<0.000000e+00> : vector<2xf32>
    %95 = vector.multi_reduction <add>, %94, %cst_39 [1] : vector<2x256xf32> to vector<2xf32>
    %96 = vector.shape_cast %95 : vector<2xf32> to vector<2x1xf32>
    %97 = vector.extract_strided_slice %18 {offsets = [0, 10], sizes = [1, 1], strides = [1, 1]} : vector<1x128xf32> to vector<1x1xf32>
    %98 = vector.broadcast %97 : vector<1x1xf32> to vector<2x1xf32>
    %99 = arith.addf %96, %98 : vector<2x1xf32>
    %c0_40 = arith.constant 0 : index
    %c10 = arith.constant 10 : index
    %100 = vector.load %arg4[%c0_40, %c10] : memref<2x128xf32, #tpu.memory_space<vmem>>, vector<2x1xf32>
    tpu.vector_store %arg4[%c0_40, %c10], %99 {strides = array<i32>} : memref<2x128xf32, #tpu.memory_space<vmem>>, vector<2x1xf32>,
    %101 = vector.extract_strided_slice %20 {offsets = [0, 2816], sizes = [2, 256], strides = [1, 1]} : vector<2x3328xf32> to vector<2x256xf32>
    %cst_41 = arith.constant dense<0.000000e+00> : vector<2xf32>
    %102 = vector.multi_reduction <add>, %101, %cst_41 [1] : vector<2x256xf32> to vector<2xf32>
    %103 = vector.shape_cast %102 : vector<2xf32> to vector<2x1xf32>
    %104 = vector.extract_strided_slice %18 {offsets = [0, 11], sizes = [1, 1], strides = [1, 1]} : vector<1x128xf32> to vector<1x1xf32>
    %105 = vector.broadcast %104 : vector<1x1xf32> to vector<2x1xf32>
    %106 = arith.addf %103, %105 : vector<2x1xf32>
    %c0_42 = arith.constant 0 : index
    %c11 = arith.constant 11 : index
    %107 = vector.load %arg4[%c0_42, %c11] : memref<2x128xf32, #tpu.memory_space<vmem>>, vector<2x1xf32>
    tpu.vector_store %arg4[%c0_42, %c11], %106 {strides = array<i32>} : memref<2x128xf32, #tpu.memory_space<vmem>>, vector<2x1xf32>,
    %108 = vector.extract_strided_slice %20 {offsets = [0, 3072], sizes = [2, 256], strides = [1, 1]} : vector<2x3328xf32> to vector<2x256xf32>
    %cst_43 = arith.constant dense<0.000000e+00> : vector<2xf32>
    %109 = vector.multi_reduction <add>, %108, %cst_43 [1] : vector<2x256xf32> to vector<2xf32>
    %110 = vector.shape_cast %109 : vector<2xf32> to vector<2x1xf32>
    %111 = vector.extract_strided_slice %18 {offsets = [0, 12], sizes = [1, 1], strides = [1, 1]} : vector<1x128xf32> to vector<1x1xf32>
    %112 = vector.broadcast %111 : vector<1x1xf32> to vector<2x1xf32>
    %113 = arith.addf %110, %112 : vector<2x1xf32>
    %c0_44 = arith.constant 0 : index
    %c12 = arith.constant 12 : index
    %114 = vector.load %arg4[%c0_44, %c12] : memref<2x128xf32, #tpu.memory_space<vmem>>, vector<2x1xf32>
    tpu.vector_store %arg4[%c0_44, %c12], %113 {strides = array<i32>} : memref<2x128xf32, #tpu.memory_space<vmem>>, vector<2x1xf32>,
    return
  }
}

</mosaic_0001>

<llo_original>
// kernel: biovil_v2_forward.1
$region0: #{biovil_v2_forward.1}
  #allocation0 [shape = 'u32[]', space=smem, size = 0x4, offset = 0x4, fixed_abs, tag = 'smem constant byte address 0x4 - core index']
  #allocation1 [shape = 'u32[144,128]{1,0:T(1,128)}', space=vmem, size = 0x12000, scoped, tag = 'internal scratch']
  %s0 = inlined_call_operand.vmem [shape: bf16[32,64], index: 0, kind: input, shape index: {}]
  %s1 = inlined_call_operand.vmem [shape: bf16[64,64], index: 1, kind: input, shape index: {}]
  %s2 = inlined_call_operand.vmem [shape: bf16[64,3328], index: 2, kind: input, shape index: {}]
  %s3 = inlined_call_operand.vmem [shape: f32[8,3328], index: 3, kind: input, shape index: {}]
  %s4 = inlined_call_operand.hbm [shape: f32[2,128], index: 4, kind: output, shape index: {}]
  %s5 = sld [smem:[#allocation0]]
  $region26: #{biovil_v2_forward.1} parent=0
    _
  %s7 = ssub.s32 1, %s5
  %s8 = scalar_select 0, %s7, %s5
  $region1: #{biovil_v2_forward.1} parent=0
    #allocation2 [shape = 'u8[1024]{0}', space=vmem, size = 0x400, scoped, tag = 'output window, operand 0, single buffered']
    #allocation3 [shape = 's32[1]{0}', space=sflag, size = 0x4, scoped, tag = 'scoped memory for biovil_v2_forward.1']
    %9 = vsyncpa [#allocation3], 0
    // Predicated region
    $region2: #{biovil_v2_forward.1} parent=1 // pred_check
      _
    $region3: #{biovil_v2_forward.1} parent=1 // pred_check_branch
      %11 = sbr.rel (0) target = $region5
    $region4: #{biovil_v2_forward.1} parent=1 // pred_region
      _
    $region5: #{biovil_v2_forward.1} parent=1 // pred_fallthru
      _
    // Predicated region
    $region6: #{biovil_v2_forward.1} parent=1 // pred_check
      _
    $region7: #{biovil_v2_forward.1} parent=1 // pred_check_branch
      %13 = sbr.rel (0) target = $region9
    $region8: #{biovil_v2_forward.1} parent=1 // pred_region
      _
    $region9: #{biovil_v2_forward.1} parent=1 // pred_fallthru
      _
    // Predicated region
    $region10: #{biovil_v2_forward.1} parent=1 // pred_check
      _
    $region11: #{biovil_v2_forward.1} parent=1 // pred_check_branch
      %15 = sbr.rel (0) target = $region13
    $region12: #{biovil_v2_forward.1} parent=1 // pred_region
      _
    $region13: #{biovil_v2_forward.1} parent=1 // pred_fallthru
      _
    // Predicated region
    $region14: #{biovil_v2_forward.1} parent=1 // pred_check
      _
    $region15: #{biovil_v2_forward.1} parent=1 // pred_check_branch
      %17 = sbr.rel (0) target = $region17
    $region16: #{biovil_v2_forward.1} parent=1 // pred_region
      _
    $region17: #{biovil_v2_forward.1} parent=1 // pred_fallthru
      _
    %v19 = vld [vmem:[%s0] sm:$0xf]
    %v20 = vld [vmem:[%s0 + $0x4] sm:$0xf]
    %v21 = vld [vmem:[%s0 + $0x8] sm:$0xf]
    %v22 = vld [vmem:[%s0 + $0xc] sm:$0xf]
    %v23 = vld [vmem:[%s1] sm:$0xf]
    %v24 = vld [vmem:[%s1 + $0x4] sm:$0xf]
    %v25 = vld [vmem:[%s1 + $0x8] sm:$0xf]
    %v26 = vld [vmem:[%s1 + $0xc] sm:$0xf]
    %v27 = vld [vmem:[%s1 + $0x10] sm:$0xf]
    %v28 = vld [vmem:[%s1 + $0x14] sm:$0xf]
    %v29 = vld [vmem:[%s1 + $0x18] sm:$0xf]
    %v30 = vld [vmem:[%s1 + $0x1c] sm:$0xf]
    %v35 = vunpack.c.l.b16 %v19
    %v36 = vunpack.c.l.b16 %v20
    %v37 = vunpack.c.l.b16 %v21
    %v38 = vunpack.c.l.b16 %v22
    %v39 = vpack.c.b16 %v36, %v35
    %v40 = vpack.c.b16 %v38, %v37
    %v49 = vunpack.c.l.b16 %v23
    %v50 = vunpack.c.l.b16 %v24
    %v51 = vunpack.c.l.b16 %v25
    %v52 = vunpack.c.l.b16 %v26
    %v53 = vunpack.c.l.b16 %v27
    %v54 = vunpack.c.l.b16 %v28
    %v55 = vunpack.c.l.b16 %v29
    %v56 = vunpack.c.l.b16 %v30
    %v57 = vpack.c.b16 %v50, %v49
    %v58 = vpack.c.b16 %v52, %v51
    %v59 = vpack.c.b16 %v54, %v53
    %v60 = vpack.c.b16 %v56, %v55
    %vm65 = vcmask 523264
    %v67 = vsel %vm65, %v39, 0
    %v70 = vsel %vm65, %v40, 0
    %72 = vmatprep.subr.bf16.mxu0 0
    %73 = vmatpush1.bf16.msra.mxu0 %v57
    %74 = vmatprep.subr.bf16.mxu0 0
    %75 = vmatpush1.bf16.msra.mxu0 %v58
    %76 = vmatprep.subr.bf16.mxu0 0
    %77 = vmatpush1.bf16.msra.mxu0 %v59
    %78 = vmatprep.subr.bf16.mxu0 0
    %79 = vmatpush1.bf16.msra.mxu0 %v60
    %80 = vmatprep.subr.bf16.mxu0 0
    %81 = vmatpush1.bf16.msra.mxu0 0
    %82 = vmatprep.subr.bf16.mxu0 0
    %83 = vmatpush1.bf16.msra.mxu0 0
    %84 = vmatprep.subr.bf16.mxu0 0
    %85 = vmatpush1.bf16.msra.mxu0 0
    %86 = vmatprep.subr.bf16.mxu0 0
    %87 = vmatpush1.bf16.msra.mxu0 0
    %88 = vmatprep.subr.bf16.mxu0 0
    %89 = vmatpush1.bf16.msra.mxu0 0
    %90 = vmatprep.subr.bf16.mxu0 0
    %91 = vmatpush1.bf16.msra.mxu0 0
    %92 = vmatprep.subr.bf16.mxu0 0
    %93 = vmatpush1.bf16.msra.mxu0 0
    %94 = vmatprep.subr.bf16.mxu0 0
    %95 = vmatpush1.bf16.msra.mxu0 0
    %96 = vmatprep.subr.bf16.mxu0 0
    %97 = vmatpush1.bf16.msra.mxu0 0
    %98 = vmatprep.subr.bf16.mxu0 0
    %99 = vmatpush1.bf16.msra.mxu0 0
    %100 = vmatprep.subr.bf16.mxu0 0
    %101 = vmatpush1.bf16.msra.mxu0 0
    %102 = vmatprep.subr.bf16.mxu0 0
    %103 = vmatpush1.bf16.msra.mxu0 0
    %104 = vmatprep.mubr.bf16.mxu0 0
    %105 = vmatmul.mubr.bf16.gmra.mrb[0].mxu0 %v67
    %v106 = vpop.f32.mrb[0].mxu0
    %v107 = vadd.f32 0.0, %v106
    %v108 = vpop.f32.mrb[0].mxu0
    %v109 = vpop.f32.mrb[0].mxu0
    %v110 = vadd.f32 0.0, %v109
    %v111 = vpop.f32.mrb[0].mxu0
    %112 = vmatprep.mubr.bf16.mxu0 0
    %113 = vmatmul.mubr.bf16.gmra.mrb[0].mxu0 %v70
    %v114 = vpop.f32.mrb[0].mxu0
    %v115 = vadd.f32 0.0, %v114
    %v116 = vpop.f32.mrb[0].mxu0
    %v117 = vpop.f32.mrb[0].mxu0
    %v118 = vadd.f32 0.0, %v117
    %v119 = vpop.f32.mrb[0].mxu0
    %120 = vdwg.mxu0
    %v121 = vmax.f32 %v107, 0.0
    %v122 = vmax.f32 %v110, 0.0
    %v123 = vmax.f32 %v115, 0.0
    %v124 = vmax.f32 %v118, 0.0
    %v125 = vsel %vm65, %v121, 0.0
    %v126 = vsel %vm65, %v122, 0.0
    %v127 = vadd.f32 %v125, %v126
    %v128 = vrot.slane %v127, 4
    %v129 = vadd.f32 %v127, %v128
    %v130 = vrot.slane %v129, 2
    %v131 = vadd.f32 %v129, %v130
    %v132 = vrot.slane %v131, 1
    %v133 = vadd.f32 %v131, %v132
    %v134 = vsel %vm65, %v123, 0.0
    %v135 = vsel %vm65, %v124, 0.0
    %v136 = vadd.f32 %v134, %v135
    %v137 = vrot.slane %v136, 4
    %v138 = vadd.f32 %v136, %v137
    %v139 = vrot.slane %v138, 2
    %v140 = vadd.f32 %v138, %v139
    %v141 = vrot.slane %v140, 1
    %v142 = vadd.f32 %v140, %v141
    %v143 = vrcp.pop 16.0
    %v144 = vmul.f32 %v133, %v143
    %v145 = vmul.f32 %v142, %v143
    %v146 = vld [vmem:[%s3] ss:$8 sm:$0xf]
    %v147 = vld [vmem:[%s3] ss:$8 sm:$0xf0]
    %v148 = vor.u32 %v146, %v147
    %s149 = scalar_lea.vmem %s3, 64
    %v150 = vld [vmem:[%s149] ss:$8 sm:$0xf]
    %v151 = vld [vmem:[%s149] ss:$8 sm:$0xf0]
    %v152 = vor.u32 %v150, %v151
    %s153 = scalar_lea.vmem %s3, 128
    %v154 = vld [vmem:[%s153] ss:$8 sm:$0xf]
    %v155 = vld [vmem:[%s153] ss:$8 sm:$0xf0]
    %v156 = vor.u32 %v154, %v155
    %s157 = scalar_lea.vmem %s3, 192
    %v158 = vld [vmem:[%s157] ss:$8 sm:$0x3]
    %v159 = vpack.c.bf16 %v144, %v144
    %v160 = vpack.c.bf16 %v145, %v145
    %v161 = vld [vmem:[%s2] sm:$0xff]
    %v162 = vld [vmem:[%s2 + $0x8] sm:$0xff]
    %v163 = vld [vmem:[%s2 + $0x10] sm:$0xff]
    %v164 = vld [vmem:[%s2 + $0x18] sm:$0xff]
    %v165 = vld [vmem:[%s2 + $0x20] sm:$0xff]
    %v166 = vld [vmem:[%s2 + $0x28] sm:$0xff]
    %v167 = vld [vmem:[%s2 + $0x30] sm:$0xff]
    %v168 = vld [vmem:[%s2 + $0x38] sm:$0xff]
    %v169 = vld [vmem:[%s2 + $0x40] sm:$0xff]
    %v170 = vld [vmem:[%s2 + $0x48] sm:$0xff]
    %v171 = vld [vmem:[%s2 + $0x50] sm:$0xff]
    %v172 = vld [vmem:[%s2 + $0x58] sm:$0xff]
    %v173 = vld [vmem:[%s2 + $0x60] sm:$0xff]
    %v174 = vld [vmem:[%s2 + $0x68] sm:$0xff]
    %v175 = vld [vmem:[%s2 + $0x70] sm:$0xff]
    %v176 = vld [vmem:[%s2 + $0x78] sm:$0xff]
    %v177 = vld [vmem:[%s2 + $0x80] sm:$0xff]
    %v178 = vld [vmem:[%s2 + $0x88] sm:$0xff]
    %v179 = vld [vmem:[%s2 + $0x90] sm:$0xff]
    %v180 = vld [vmem:[%s2 + $0x98] sm:$0xff]
    %v181 = vld [vmem:[%s2 + $0xa0] sm:$0xff]
    %v182 = vld [vmem:[%s2 + $0xa8] sm:$0xff]
    %v183 = vld [vmem:[%s2 + $0xb0] sm:$0xff]
    %v184 = vld [vmem:[%s2 + $0xb8] sm:$0xff]
    %v185 = vld [vmem:[%s2 + $0xc0] sm:$0xff]
    %v186 = vld [vmem:[%s2 + $0xc8] sm:$0xff]
    %v187 = vld [vmem:[%s2 + $0xd0] sm:$0xff]
    %v188 = vld [vmem:[%s2 + $0xd8] sm:$0xff]
    %v189 = vld [vmem:[%s2 + $0xe0] sm:$0xff]
    %v190 = vld [vmem:[%s2 + $0xe8] sm:$0xff]
    %v191 = vld [vmem:[%s2 + $0xf0] sm:$0xff]
    %v192 = vld [vmem:[%s2 + $0xf8] sm:$0xff]
    %v193 = vld [vmem:[%s2 + $0x100] sm:$0xff]
    %v194 = vld [vmem:[%s2 + $0x108] sm:$0xff]
    %v195 = vld [vmem:[%s2 + $0x110] sm:$0xff]
    %v196 = vld [vmem:[%s2 + $0x118] sm:$0xff]
    %v197 = vld [vmem:[%s2 + $0x120] sm:$0xff]
    %v198 = vld [vmem:[%s2 + $0x128] sm:$0xff]
    %v199 = vld [vmem:[%s2 + $0x130] sm:$0xff]
    %v200 = vld [vmem:[%s2 + $0x138] sm:$0xff]
    %v201 = vld [vmem:[%s2 + $0x140] sm:$0xff]
    %v202 = vld [vmem:[%s2 + $0x148] sm:$0xff]
    %v203 = vld [vmem:[%s2 + $0x150] sm:$0xff]
    %v204 = vld [vmem:[%s2 + $0x158] sm:$0xff]
    %v205 = vld [vmem:[%s2 + $0x160] sm:$0xff]
    %v206 = vld [vmem:[%s2 + $0x168] sm:$0xff]
    %v207 = vld [vmem:[%s2 + $0x170] sm:$0xff]
    %v208 = vld [vmem:[%s2 + $0x178] sm:$0xff]
    %v209 = vld [vmem:[%s2 + $0x180] sm:$0xff]
    %v210 = vld [vmem:[%s2 + $0x188] sm:$0xff]
    %v211 = vld [vmem:[%s2 + $0x190] sm:$0xff]
    %v212 = vld [vmem:[%s2 + $0x198] sm:$0xff]
    %v213 = vld [vmem:[%s2 + $0x1a0] sm:$0xff]
    %v214 = vld [vmem:[%s2 + $0x1a8] sm:$0xff]
    %v215 = vld [vmem:[%s2 + $0x1b0] sm:$0xff]
    %v216 = vld [vmem:[%s2 + $0x1b8] sm:$0xff]
    %v217 = vld [vmem:[%s2 + $0x1c0] sm:$0xff]
    %v218 = vld [vmem:[%s2 + $0x1c8] sm:$0xff]
    %v219 = vld [vmem:[%s2 + $0x1d0] sm:$0xff]
    %v220 = vld [vmem:[%s2 + $0x1d8] sm:$0xff]
    %v221 = vld [vmem:[%s2 + $0x1e0] sm:$0xff]
    %v222 = vld [vmem:[%s2 + $0x1e8] sm:$0xff]
    %v223 = vld [vmem:[%s2 + $0x1f0] sm:$0xff]
    %v224 = vld [vmem:[%s2 + $0x1f8] sm:$0xff]
    %v225 = vld [vmem:[%s2 + $0x200] sm:$0xff]
    %v226 = vld [vmem:[%s2 + $0x208] sm:$0xff]
    %v227 = vld [vmem:[%s2 + $0x210] sm:$0xff]
    %v228 = vld [vmem:[%s2 + $0x218] sm:$0xff]
    %v229 = vld [vmem:[%s2 + $0x220] sm:$0xff]
    %v230 = vld [vmem:[%s2 + $0x228] sm:$0xff]
    %v231 = vld [vmem:[%s2 + $0x230] sm:$0xff]
    %v232 = vld [vmem:[%s2 + $0x238] sm:$0xff]
    %v233 = vld [vmem:[%s2 + $0x240] sm:$0xff]
    %v234 = vld [vmem:[%s2 + $0x248] sm:$0xff]
    %v235 = vld [vmem:[%s2 + $0x250] sm:$0xff]
    %v236 = vld [vmem:[%s2 + $0x258] sm:$0xff]
    %v237 = vld [vmem:[%s2 + $0x260] sm:$0xff]
    %v238 = vld [vmem:[%s2 + $0x268] sm:$0xff]
    %v239 = vld [vmem:[%s2 + $0x270] sm:$0xff]
    %v240 = vld [vmem:[%s2 + $0x278] sm:$0xff]
    %v241 = vld [vmem:[%s2 + $0x280] sm:$0xff]
    %v242 = vld [vmem:[%s2 + $0x288] sm:$0xff]
    %v243 = vld [vmem:[%s2 + $0x290] sm:$0xff]
    %v244 = vld [vmem:[%s2 + $0x298] sm:$0xff]
    %v245 = vld [vmem:[%s2 + $0x2a0] sm:$0xff]
    %v246 = vld [vmem:[%s2 + $0x2a8] sm:$0xff]
    %v247 = vld [vmem:[%s2 + $0x2b0] sm:$0xff]
    %v248 = vld [vmem:[%s2 + $0x2b8] sm:$0xff]
    %v249 = vld [vmem:[%s2 + $0x2c0] sm:$0xff]
    %v250 = vld [vmem:[%s2 + $0x2c8] sm:$0xff]
    %v251 = vld [vmem:[%s2 + $0x2d0] sm:$0xff]
    %v252 = vld [vmem:[%s2 + $0x2d8] sm:$0xff]
    %v253 = vld [vmem:[%s2 + $0x2e0] sm:$0xff]
    %v254 = vld [vmem:[%s2 + $0x2e8] sm:$0xff]
    %v255 = vld [vmem:[%s2 + $0x2f0] sm:$0xff]
    %v256 = vld [vmem:[%s2 + $0x2f8] sm:$0xff]
    %v257 = vld [vmem:[%s2 + $0x300] sm:$0xff]
    %v258 = vld [vmem:[%s2 + $0x308] sm:$0xff]
    %v259 = vld [vmem:[%s2 + $0x310] sm:$0xff]
    %v260 = vld [vmem:[%s2 + $0x318] sm:$0xff]
    %v261 = vld [vmem:[%s2 + $0x320] sm:$0xff]
    %v262 = vld [vmem:[%s2 + $0x328] sm:$0xff]
    %v263 = vld [vmem:[%s2 + $0x330] sm:$0xff]
    %v264 = vld [vmem:[%s2 + $0x338] sm:$0xff]
    %v269 = vlaneseq
    %v270 = vshrl.u32 %v269, 7
    %v271 = vsub.s32 0, %v270
    %v272 = vrot.slane %v148, %v271
    %v273 = vlaneseq
    %v274 = vshrl.u32 %v273, 7
    %v275 = vsub.s32 1, %v274
    %v276 = vrot.slane %v148, %v275
    %v277 = vlaneseq
    %v278 = vshrl.u32 %v277, 7
    %v279 = vsub.s32 2, %v278
    %v280 = vrot.slane %v148, %v279
    %v281 = vlaneseq
    %v282 = vshrl.u32 %v281, 7
    %v283 = vsub.s32 3, %v282
    %v284 = vrot.slane %v148, %v283
    %v285 = vlaneseq
    %v286 = vshrl.u32 %v285, 7
    %v287 = vsub.s32 4, %v286
    %v288 = vrot.slane %v148, %v287
    %v289 = vlaneseq
    %v290 = vshrl.u32 %v289, 7
    %v291 = vsub.s32 5, %v290
    %v292 = vrot.slane %v148, %v291
    %v293 = vlaneseq
    %v294 = vshrl.u32 %v293, 7
    %v295 = vsub.s32 6, %v294
    %v296 = vrot.slane %v148, %v295
    %v297 = vlaneseq
    %v298 = vshrl.u32 %v297, 7
    %v299 = vsub.s32 7, %v298
    %v300 = vrot.slane %v148, %v299
    %v301 = vlaneseq
    %v302 = vshrl.u32 %v301, 7
    %v303 = vsub.s32 0, %v302
    %v304 = vrot.slane %v152, %v303
    %v305 = vlaneseq
    %v306 = vshrl.u32 %v305, 7
    %v307 = vsub.s32 1, %v306
    %v308 = vrot.slane %v152, %v307
    %v309 = vlaneseq
    %v310 = vshrl.u32 %v309, 7
    %v311 = vsub.s32 2, %v310
    %v312 = vrot.slane %v152, %v311
    %v313 = vlaneseq
    %v314 = vshrl.u32 %v313, 7
    %v315 = vsub.s32 3, %v314
    %v316 = vrot.slane %v152, %v315
    %v317 = vlaneseq
    %v318 = vshrl.u32 %v317, 7
    %v319 = vsub.s32 4, %v318
    %v320 = vrot.slane %v152, %v319
    %v321 = vlaneseq
    %v322 = vshrl.u32 %v321, 7
    %v323 = vsub.s32 5, %v322
    %v324 = vrot.slane %v152, %v323
    %v325 = vlaneseq
    %v326 = vshrl.u32 %v325, 7
    %v327 = vsub.s32 6, %v326
    %v328 = vrot.slane %v152, %v327
    %v329 = vlaneseq
    %v330 = vshrl.u32 %v329, 7
    %v331 = vsub.s32 7, %v330
    %v332 = vrot.slane %v152, %v331
    %v333 = vlaneseq
    %v334 = vshrl.u32 %v333, 7
    %v335 = vsub.s32 0, %v334
    %v336 = vrot.slane %v156, %v335
    %v337 = vlaneseq
    %v338 = vshrl.u32 %v337, 7
    %v339 = vsub.s32 1, %v338
    %v340 = vrot.slane %v156, %v339
    %v341 = vlaneseq
    %v342 = vshrl.u32 %v341, 7
    %v343 = vsub.s32 2, %v342
    %v344 = vrot.slane %v156, %v343
    %v345 = vlaneseq
    %v346 = vshrl.u32 %v345, 7
    %v347 = vsub.s32 3, %v346
    %v348 = vrot.slane %v156, %v347
    %v349 = vlaneseq
    %v350 = vshrl.u32 %v349, 7
    %v351 = vsub.s32 4, %v350
    %v352 = vrot.slane %v156, %v351
    %v353 = vlaneseq
    %v354 = vshrl.u32 %v353, 7
    %v355 = vsub.s32 5, %v354
    %v356 = vrot.slane %v156, %v355
    %v357 = vlaneseq
    %v358 = vshrl.u32 %v357, 7
    %v359 = vsub.s32 6, %v358
    %v360 = vrot.slane %v156, %v359
    %v361 = vlaneseq
    %v362 = vshrl.u32 %v361, 7
    %v363 = vsub.s32 7, %v362
    %v364 = vrot.slane %v156, %v363
    %v365 = vlaneseq
    %v366 = vshrl.u32 %v365, 7
    %v367 = vsub.s32 0, %v366
    %v368 = vrot.slane %v158, %v367
    %v369 = vlaneseq
    %v370 = vshrl.u32 %v369, 7
    %v371 = vsub.s32 1, %v370
    %v372 = vrot.slane %v158, %v371
    %v401 = vunpack.c.l.b16 %v159
    %v402 = vunpack.c.l.b16 %v160
    %vm403 = vcmask 1041409
    %v404 = vsel %vm403, %v402, %v401
    %v405 = vpack.c.b16 %v404, %v404
    %v510 = vunpack.c.l.b16 %v161
    %v511 = vunpack.c.h.b16 %v161
    %v512 = vunpack.c.l.b16 %v162
    %v513 = vunpack.c.h.b16 %v162
    %v514 = vunpack.c.l.b16 %v163
    %v515 = vunpack.c.h.b16 %v163
    %v516 = vunpack.c.l.b16 %v164
    %v517 = vunpack.c.h.b16 %v164
    %v518 = vunpack.c.l.b16 %v165
    %v519 = vunpack.c.h.b16 %v165
    %v520 = vunpack.c.l.b16 %v166
    %v521 = vunpack.c.h.b16 %v166
    %v522 = vunpack.c.l.b16 %v167
    %v523 = vunpack.c.h.b16 %v167
    %v524 = vunpack.c.l.b16 %v168
    %v525 = vunpack.c.h.b16 %v168
    %v526 = vunpack.c.l.b16 %v169
    %v527 = vunpack.c.h.b16 %v169
    %v528 = vunpack.c.l.b16 %v170
    %v529 = vunpack.c.h.b16 %v170
    %v530 = vunpack.c.l.b16 %v171
    %v531 = vunpack.c.h.b16 %v171
    %v532 = vunpack.c.l.b16 %v172
    %v533 = vunpack.c.h.b16 %v172
    %v534 = vunpack.c.l.b16 %v173
    %v535 = vunpack.c.h.b16 %v173
    %v536 = vunpack.c.l.b16 %v174
    %v537 = vunpack.c.h.b16 %v174
    %v538 = vunpack.c.l.b16 %v175
    %v539 = vunpack.c.h.b16 %v175
    %v540 = vunpack.c.l.b16 %v176
    %v541 = vunpack.c.h.b16 %v176
    %v542 = vunpack.c.l.b16 %v177
    %v543 = vunpack.c.h.b16 %v177
    %v544 = vunpack.c.l.b16 %v178
    %v545 = vunpack.c.h.b16 %v178
    %v546 = vunpack.c.l.b16 %v179
    %v547 = vunpack.c.h.b16 %v179
    %v548 = vunpack.c.l.b16 %v180
    %v549 = vunpack.c.h.b16 %v180
    %v550 = vunpack.c.l.b16 %v181
    %v551 = vunpack.c.h.b16 %v181
    %v552 = vunpack.c.l.b16 %v182
    %v553 = vunpack.c.h.b16 %v182
    %v554 = vunpack.c.l.b16 %v183
    %v555 = vunpack.c.h.b16 %v183
    %v556 = vunpack.c.l.b16 %v184
    %v557 = vunpack.c.h.b16 %v184
    %v558 = vunpack.c.l.b16 %v185
    %v559 = vunpack.c.h.b16 %v185
    %v560 = vunpack.c.l.b16 %v186
    %v561 = vunpack.c.h.b16 %v186
    %v562 = vunpack.c.l.b16 %v187
    %v563 = vunpack.c.h.b16 %v187
    %v564 = vunpack.c.l.b16 %v188
    %v565 = vunpack.c.h.b16 %v188
    %v566 = vunpack.c.l.b16 %v189
    %v567 = vunpack.c.h.b16 %v189
    %v568 = vunpack.c.l.b16 %v190
    %v569 = vunpack.c.h.b16 %v190
    %v570 = vunpack.c.l.b16 %v191
    %v571 = vunpack.c.h.b16 %v191
    %v572 = vunpack.c.l.b16 %v192
    %v573 = vunpack.c.h.b16 %v192
    %v574 = vunpack.c.l.b16 %v193
    %v575 = vunpack.c.h.b16 %v193
    %v576 = vunpack.c.l.b16 %v194
    %v577 = vunpack.c.h.b16 %v194
    %v578 = vunpack.c.l.b16 %v195
    %v579 = vunpack.c.h.b16 %v195
    %v580 = vunpack.c.l.b16 %v196
    %v581 = vunpack.c.h.b16 %v196
    %v582 = vunpack.c.l.b16 %v197
    %v583 = vunpack.c.h.b16 %v197
    %v584 = vunpack.c.l.b16 %v198
    %v585 = vunpack.c.h.b16 %v198
    %v586 = vunpack.c.l.b16 %v199
    %v587 = vunpack.c.h.b16 %v199
    %v588 = vunpack.c.l.b16 %v200
    %v589 = vunpack.c.h.b16 %v200
    %v590 = vunpack.c.l.b16 %v201
    %v591 = vunpack.c.h.b16 %v201
    %v592 = vunpack.c.l.b16 %v202
    %v593 = vunpack.c.h.b16 %v202
    %v594 = vunpack.c.l.b16 %v203
    %v595 = vunpack.c.h.b16 %v203
    %v596 = vunpack.c.l.b16 %v204
    %v597 = vunpack.c.h.b16 %v204
    %v598 = vunpack.c.l.b16 %v205
    %v599 = vunpack.c.h.b16 %v205
    %v600 = vunpack.c.l.b16 %v206
    %v601 = vunpack.c.h.b16 %v206
    %v602 = vunpack.c.l.b16 %v207
    %v603 = vunpack.c.h.b16 %v207
    %v604 = vunpack.c.l.b16 %v208
    %v605 = vunpack.c.h.b16 %v208
    %v606 = vunpack.c.l.b16 %v209
    %v607 = vunpack.c.h.b16 %v209
    %v608 = vunpack.c.l.b16 %v210
    %v609 = vunpack.c.h.b16 %v210
    %v610 = vunpack.c.l.b16 %v211
    %v611 = vunpack.c.h.b16 %v211
    %v612 = vunpack.c.l.b16 %v212
    %v613 = vunpack.c.h.b16 %v212
    %v614 = vunpack.c.l.b16 %v213
    %v615 = vunpack.c.h.b16 %v213
    %v616 = vunpack.c.l.b16 %v214
    %v617 = vunpack.c.h.b16 %v214
    %v618 = vunpack.c.l.b16 %v215
    %v619 = vunpack.c.h.b16 %v215
    %v620 = vunpack.c.l.b16 %v216
    %v621 = vunpack.c.h.b16 %v216
    %v622 = vunpack.c.l.b16 %v217
    %v623 = vunpack.c.h.b16 %v217
    %v624 = vunpack.c.l.b16 %v218
    %v625 = vunpack.c.h.b16 %v218
    %v626 = vunpack.c.l.b16 %v219
    %v627 = vunpack.c.h.b16 %v219
    %v628 = vunpack.c.l.b16 %v220
    %v629 = vunpack.c.h.b16 %v220
    %v630 = vunpack.c.l.b16 %v221
    %v631 = vunpack.c.h.b16 %v221
    %v632 = vunpack.c.l.b16 %v222
    %v633 = vunpack.c.h.b16 %v222
    %v634 = vunpack.c.l.b16 %v223
    %v635 = vunpack.c.h.b16 %v223
    %v636 = vunpack.c.l.b16 %v224
    %v637 = vunpack.c.h.b16 %v224
    %v638 = vunpack.c.l.b16 %v225
    %v639 = vunpack.c.h.b16 %v225
    %v640 = vunpack.c.l.b16 %v226
    %v641 = vunpack.c.h.b16 %v226
    %v642 = vunpack.c.l.b16 %v227
    %v643 = vunpack.c.h.b16 %v227
    %v644 = vunpack.c.l.b16 %v228
    %v645 = vunpack.c.h.b16 %v228
    %v646 = vunpack.c.l.b16 %v229
    %v647 = vunpack.c.h.b16 %v229
    %v648 = vunpack.c.l.b16 %v230
    %v649 = vunpack.c.h.b16 %v230
    %v650 = vunpack.c.l.b16 %v231
    %v651 = vunpack.c.h.b16 %v231
    %v652 = vunpack.c.l.b16 %v232
    %v653 = vunpack.c.h.b16 %v232
    %v654 = vunpack.c.l.b16 %v233
    %v655 = vunpack.c.h.b16 %v233
    %v656 = vunpack.c.l.b16 %v234
    %v657 = vunpack.c.h.b16 %v234
    %v658 = vunpack.c.l.b16 %v235
    %v659 = vunpack.c.h.b16 %v235
    %v660 = vunpack.c.l.b16 %v236
    %v661 = vunpack.c.h.b16 %v236
    %v662 = vunpack.c.l.b16 %v237
    %v663 = vunpack.c.h.b16 %v237
    %v664 = vunpack.c.l.b16 %v238
    %v665 = vunpack.c.h.b16 %v238
    %v666 = vunpack.c.l.b16 %v239
    %v667 = vunpack.c.h.b16 %v239
    %v668 = vunpack.c.l.b16 %v240
    %v669 = vunpack.c.h.b16 %v240
    %v670 = vunpack.c.l.b16 %v241
    %v671 = vunpack.c.h.b16 %v241
    %v672 = vunpack.c.l.b16 %v242
    %v673 = vunpack.c.h.b16 %v242
    %v674 = vunpack.c.l.b16 %v243
    %v675 = vunpack.c.h.b16 %v243
    %v676 = vunpack.c.l.b16 %v244
    %v677 = vunpack.c.h.b16 %v244
    %v678 = vunpack.c.l.b16 %v245
    %v679 = vunpack.c.h.b16 %v245
    %v680 = vunpack.c.l.b16 %v246
    %v681 = vunpack.c.h.b16 %v246
    %v682 = vunpack.c.l.b16 %v247
    %v683 = vunpack.c.h.b16 %v247
    %v684 = vunpack.c.l.b16 %v248
    %v685 = vunpack.c.h.b16 %v248
    %v686 = vunpack.c.l.b16 %v249
    %v687 = vunpack.c.h.b16 %v249
    %v688 = vunpack.c.l.b16 %v250
    %v689 = vunpack.c.h.b16 %v250
    %v690 = vunpack.c.l.b16 %v251
    %v691 = vunpack.c.h.b16 %v251
    %v692 = vunpack.c.l.b16 %v252
    %v693 = vunpack.c.h.b16 %v252
    %v694 = vunpack.c.l.b16 %v253
    %v695 = vunpack.c.h.b16 %v253
    %v696 = vunpack.c.l.b16 %v254
    %v697 = vunpack.c.h.b16 %v254
    %v698 = vunpack.c.l.b16 %v255
    %v699 = vunpack.c.h.b16 %v255
    %v700 = vunpack.c.l.b16 %v256
    %v701 = vunpack.c.h.b16 %v256
    %v702 = vunpack.c.l.b16 %v257
    %v703 = vunpack.c.h.b16 %v257
    %v704 = vunpack.c.l.b16 %v258
    %v705 = vunpack.c.h.b16 %v258
    %v706 = vunpack.c.l.b16 %v259
    %v707 = vunpack.c.h.b16 %v259
    %v708 = vunpack.c.l.b16 %v260
    %v709 = vunpack.c.h.b16 %v260
    %v710 = vunpack.c.l.b16 %v261
    %v711 = vunpack.c.h.b16 %v261
    %v712 = vunpack.c.l.b16 %v262
    %v713 = vunpack.c.h.b16 %v262
    %v714 = vunpack.c.l.b16 %v263
    %v715 = vunpack.c.h.b16 %v263
    %v716 = vunpack.c.l.b16 %v264
    %v717 = vunpack.c.h.b16 %v264
    %v718 = vpack.c.b16 %v536, %v510
    %v719 = vpack.c.b16 %v537, %v511
    %v720 = vpack.c.b16 %v538, %v512
    %v721 = vpack.c.b16 %v539, %v513
    %v722 = vpack.c.b16 %v540, %v514
    %v723 = vpack.c.b16 %v541, %v515
    %v724 = vpack.c.b16 %v542, %v516
    %v725 = vpack.c.b16 %v543, %v517
    %v726 = vpack.c.b16 %v544, %v518
    %v727 = vpack.c.b16 %v545, %v519
    %v728 = vpack.c.b16 %v546, %v520
    %v729 = vpack.c.b16 %v547, %v521
    %v730 = vpack.c.b16 %v548, %v522
    %v731 = vpack.c.b16 %v549, %v523
    %v732 = vpack.c.b16 %v550, %v524
    %v733 = vpack.c.b16 %v551, %v525
    %v734 = vpack.c.b16 %v552, %v526
    %v735 = vpack.c.b16 %v553, %v527
    %v736 = vpack.c.b16 %v554, %v528
    %v737 = vpack.c.b16 %v555, %v529
    %v738 = vpack.c.b16 %v556, %v530
    %v739 = vpack.c.b16 %v557, %v531
    %v740 = vpack.c.b16 %v558, %v532
    %v741 = vpack.c.b16 %v559, %v533
    %v742 = vpack.c.b16 %v560, %v534
    %v743 = vpack.c.b16 %v561, %v535
    %v744 = vpack.c.b16 %v588, %v562
    %v745 = vpack.c.b16 %v589, %v563
    %v746 = vpack.c.b16 %v590, %v564
    %v747 = vpack.c.b16 %v591, %v565
    %v748 = vpack.c.b16 %v592, %v566
    %v749 = vpack.c.b16 %v593, %v567
    %v750 = vpack.c.b16 %v594, %v568
    %v751 = vpack.c.b16 %v595, %v569
    %v752 = vpack.c.b16 %v596, %v570
    %v753 = vpack.c.b16 %v597, %v571
    %v754 = vpack.c.b16 %v598, %v572
    %v755 = vpack.c.b16 %v599, %v573
    %v756 = vpack.c.b16 %v600, %v574
    %v757 = vpack.c.b16 %v601, %v575
    %v758 = vpack.c.b16 %v602, %v576
    %v759 = vpack.c.b16 %v603, %v577
    %v760 = vpack.c.b16 %v604, %v578
    %v761 = vpack.c.b16 %v605, %v579
    %v762 = vpack.c.b16 %v606, %v580
    %v763 = vpack.c.b16 %v607, %v581
    %v764 = vpack.c.b16 %v608, %v582
    %v765 = vpack.c.b16 %v609, %v583
    %v766 = vpack.c.b16 %v610, %v584
    %v767 = vpack.c.b16 %v611, %v585
    %v768 = vpack.c.b16 %v612, %v586
    %v769 = vpack.c.b16 %v613, %v587
    %v770 = vpack.c.b16 %v640, %v614
    %v771 = vpack.c.b16 %v641, %v615
    %v772 = vpack.c.b16 %v642, %v616
    %v773 = vpack.c.b16 %v643, %v617
    %v774 = vpack.c.b16 %v644, %v618
    %v775 = vpack.c.b16 %v645, %v619
    %v776 = vpack.c.b16 %v646, %v620
    %v777 = vpack.c.b16 %v647, %v621
    %v778 = vpack.c.b16 %v648, %v622
    %v779 = vpack.c.b16 %v649, %v623
    %v780 = vpack.c.b16 %v650, %v624
    %v781 = vpack.c.b16 %v651, %v625
    %v782 = vpack.c.b16 %v652, %v626
    %v783 = vpack.c.b16 %v653, %v627
    %v784 = vpack.c.b16 %v654, %v628
    %v785 = vpack.c.b16 %v655, %v629
    %v786 = vpack.c.b16 %v656, %v630
    %v787 = vpack.c.b16 %v657, %v631
    %v788 = vpack.c.b16 %v658, %v632
    %v789 = vpack.c.b16 %v659, %v633
    %v790 = vpack.c.b16 %v660, %v634
    %v791 = vpack.c.b16 %v661, %v635
    %v792 = vpack.c.b16 %v662, %v636
    %v793 = vpack.c.b16 %v663, %v637
    %v794 = vpack.c.b16 %v664, %v638
    %v795 = vpack.c.b16 %v665, %v639
    %v796 = vpack.c.b16 %v692, %v666
    %v797 = vpack.c.b16 %v693, %v667
    %v798 = vpack.c.b16 %v694, %v668
    %v799 = vpack.c.b16 %v695, %v669
    %v800 = vpack.c.b16 %v696, %v670
    %v801 = vpack.c.b16 %v697, %v671
    %v802 = vpack.c.b16 %v698, %v672
    %v803 = vpack.c.b16 %v699, %v673
    %v804 = vpack.c.b16 %v700, %v674
    %v805 = vpack.c.b16 %v701, %v675
    %v806 = vpack.c.b16 %v702, %v676
    %v807 = vpack.c.b16 %v703, %v677
    %v808 = vpack.c.b16 %v704, %v678
    %v809 = vpack.c.b16 %v705, %v679
    %v810 = vpack.c.b16 %v706, %v680
    %v811 = vpack.c.b16 %v707, %v681
    %v812 = vpack.c.b16 %v708, %v682
    %v813 = vpack.c.b16 %v709, %v683
    %v814 = vpack.c.b16 %v710, %v684
    %v815 = vpack.c.b16 %v711, %v685
    %v816 = vpack.c.b16 %v712, %v686
    %v817 = vpack.c.b16 %v713, %v687
    %v818 = vpack.c.b16 %v714, %v688
    %v819 = vpack.c.b16 %v715, %v689
    %v820 = vpack.c.b16 %v716, %v690
    %v821 = vpack.c.b16 %v717, %v691
    %v927 = vsel %vm65, %v405, 0
    %929 = vmatprep.subr.bf16.mxu0 %v719
    %930 = vmatpush1.bf16.msra.mxu0 %v718
    %931 = vmatprep.subr.bf16.mxu0 %v745
    %932 = vmatpush1.bf16.msra.mxu0 %v744
    %933 = vmatprep.subr.bf16.mxu0 %v771
    %934 = vmatpush1.bf16.msra.mxu0 %v770
    %935 = vmatprep.subr.bf16.mxu0 %v797
    %936 = vmatpush1.bf16.msra.mxu0 %v796
    %937 = vmatprep.subr.bf16.mxu0 0
    %938 = vmatpush1.bf16.msra.mxu0 0
    %939 = vmatprep.subr.bf16.mxu0 0
    %940 = vmatpush1.bf16.msra.mxu0 0
    %941 = vmatprep.subr.bf16.mxu0 0
    %942 = vmatpush1.bf16.msra.mxu0 0
    %943 = vmatprep.subr.bf16.mxu0 0
    %944 = vmatpush1.bf16.msra.mxu0 0
    %945 = vmatprep.subr.bf16.mxu0 0
    %946 = vmatpush1.bf16.msra.mxu0 0
    %947 = vmatprep.subr.bf16.mxu0 0
    %948 = vmatpush1.bf16.msra.mxu0 0
    %949 = vmatprep.subr.bf16.mxu0 0
    %950 = vmatpush1.bf16.msra.mxu0 0
    %951 = vmatprep.subr.bf16.mxu0 0
    %952 = vmatpush1.bf16.msra.mxu0 0
    %953 = vmatprep.subr.bf16.mxu0 0
    %954 = vmatpush1.bf16.msra.mxu0 0
    %955 = vmatprep.subr.bf16.mxu0 0
    %956 = vmatpush1.bf16.msra.mxu0 0
    %957 = vmatprep.subr.bf16.mxu0 0
    %958 = vmatpush1.bf16.msra.mxu0 0
    %959 = vmatprep.subr.bf16.mxu0 0
    %960 = vmatpush1.bf16.msra.mxu0 0
    %961 = vmatprep.mubr.bf16.mxu0 0
    %962 = vmatmul.mubr.bf16.gmra.mrb[0].mxu0 %v927
    %v963 = vpop.f32.mrb[0].mxu0
    %v964 = vadd.f32 %v272, %v963
    %v965 = vpop.f32.mrb[0].mxu0
    %v966 = vadd.f32 %v276, %v965
    %v967 = vpop.f32.mrb[0].mxu0
    %v968 = vpop.f32.mrb[0].mxu0
    %969 = vdwg.mxu0
    %970 = vmatprep.subr.bf16.mxu0 %v721
    %971 = vmatpush1.bf16.msra.mxu0 %v720
    %972 = vmatprep.subr.bf16.mxu0 %v747
    %973 = vmatpush1.bf16.msra.mxu0 %v746
    %974 = vmatprep.subr.bf16.mxu0 %v773
    %975 = vmatpush1.bf16.msra.mxu0 %v772
    %976 = vmatprep.subr.bf16.mxu0 %v799
    %977 = vmatpush1.bf16.msra.mxu0 %v798
    %978 = vmatprep.subr.bf16.mxu0 0
    %979 = vmatpush1.bf16.msra.mxu0 0
    %980 = vmatprep.subr.bf16.mxu0 0
    %981 = vmatpush1.bf16.msra.mxu0 0
    %982 = vmatprep.subr.bf16.mxu0 0
    %983 = vmatpush1.bf16.msra.mxu0 0
    %984 = vmatprep.subr.bf16.mxu0 0
    %985 = vmatpush1.bf16.msra.mxu0 0
    %986 = vmatprep.subr.bf16.mxu0 0
    %987 = vmatpush1.bf16.msra.mxu0 0
    %988 = vmatprep.subr.bf16.mxu0 0
    %989 = vmatpush1.bf16.msra.mxu0 0
    %990 = vmatprep.subr.bf16.mxu0 0
    %991 = vmatpush1.bf16.msra.mxu0 0
    %992 = vmatprep.subr.bf16.mxu0 0
    %993 = vmatpush1.bf16.msra.mxu0 0
    %994 = vmatprep.subr.bf16.mxu0 0
    %995 = vmatpush1.bf16.msra.mxu0 0
    %996 = vmatprep.subr.bf16.mxu0 0
    %997 = vmatpush1.bf16.msra.mxu0 0
    %998 = vmatprep.subr.bf16.mxu0 0
    %999 = vmatpush1.bf16.msra.mxu0 0
    %1000 = vmatprep.subr.bf16.mxu0 0
    %1001 = vmatpush1.bf16.msra.mxu0 0
    %1002 = vmatprep.mubr.bf16.mxu0 0
    %1003 = vmatmul.mubr.bf16.gmra.mrb[0].mxu0 %v927
    %v1004 = vpop.f32.mrb[0].mxu0
    %v1005 = vadd.f32 %v280, %v1004
    %v1006 = vpop.f32.mrb[0].mxu0
    %v1007 = vadd.f32 %v284, %v1006
    %v1008 = vpop.f32.mrb[0].mxu0
    %v1009 = vpop.f32.mrb[0].mxu0
    %1010 = vdwg.mxu0
    %1011 = vmatprep.subr.bf16.mxu0 %v723
    %1012 = vmatpush1.bf16.msra.mxu0 %v722
    %1013 = vmatprep.subr.bf16.mxu0 %v749
    %1014 = vmatpush1.bf16.msra.mxu0 %v748
    %1015 = vmatprep.subr.bf16.mxu0 %v775
    %1016 = vmatpush1.bf16.msra.mxu0 %v774
    %1017 = vmatprep.subr.bf16.mxu0 %v801
    %1018 = vmatpush1.bf16.msra.mxu0 %v800
    %1019 = vmatprep.subr.bf16.mxu0 0
    %1020 = vmatpush1.bf16.msra.mxu0 0
    %1021 = vmatprep.subr.bf16.mxu0 0
    %1022 = vmatpush1.bf16.msra.mxu0 0
    %1023 = vmatprep.subr.bf16.mxu0 0
    %1024 = vmatpush1.bf16.msra.mxu0 0
    %1025 = vmatprep.subr.bf16.mxu0 0
    %1026 = vmatpush1.bf16.msra.mxu0 0
    %1027 = vmatprep.subr.bf16.mxu0 0
    %1028 = vmatpush1.bf16.msra.mxu0 0
    %1029 = vmatprep.subr.bf16.mxu0 0
    %1030 = vmatpush1.bf16.msra.mxu0 0
    %1031 = vmatprep.subr.bf16.mxu0 0
    %1032 = vmatpush1.bf16.msra.mxu0 0
    %1033 = vmatprep.subr.bf16.mxu0 0
    %1034 = vmatpush1.bf16.msra.mxu0 0
    %1035 = vmatprep.subr.bf16.mxu0 0
    %1036 = vmatpush1.bf16.msra.mxu0 0
    %1037 = vmatprep.subr.bf16.mxu0 0
    %1038 = vmatpush1.bf16.msra.mxu0 0
    %1039 = vmatprep.subr.bf16.mxu0 0
    %1040 = vmatpush1.bf16.msra.mxu0 0
    %1041 = vmatprep.subr.bf16.mxu0 0
    %1042 = vmatpush1.bf16.msra.mxu0 0
    %1043 = vmatprep.mubr.bf16.mxu0 0
    %1044 = vmatmul.mubr.bf16.gmra.mrb[0].mxu0 %v927
    %v1045 = vpop.f32.mrb[0].mxu0
    %v1046 = vadd.f32 %v288, %v1045
    %v1047 = vpop.f32.mrb[0].mxu0
    %v1048 = vadd.f32 %v292, %v1047
    %v1049 = vpop.f32.mrb[0].mxu0
    %v1050 = vpop.f32.mrb[0].mxu0
    %1051 = vdwg.mxu0
    %1052 = vmatprep.subr.bf16.mxu0 %v725
    %1053 = vmatpush1.bf16.msra.mxu0 %v724
    %1054 = vmatprep.subr.bf16.mxu0 %v751
    %1055 = vmatpush1.bf16.msra.mxu0 %v750
    %1056 = vmatprep.subr.bf16.mxu0 %v777
    %1057 = vmatpush1.bf16.msra.mxu0 %v776
    %1058 = vmatprep.subr.bf16.mxu0 %v803
    %1059 = vmatpush1.bf16.msra.mxu0 %v802
    %1060 = vmatprep.subr.bf16.mxu0 0
    %1061 = vmatpush1.bf16.msra.mxu0 0
    %1062 = vmatprep.subr.bf16.mxu0 0
    %1063 = vmatpush1.bf16.msra.mxu0 0
    %1064 = vmatprep.subr.bf16.mxu0 0
    %1065 = vmatpush1.bf16.msra.mxu0 0
    %1066 = vmatprep.subr.bf16.mxu0 0
    %1067 = vmatpush1.bf16.msra.mxu0 0
    %1068 = vmatprep.subr.bf16.mxu0 0
    %1069 = vmatpush1.bf16.msra.mxu0 0
    %1070 = vmatprep.subr.bf16.mxu0 0
    %1071 = vmatpush1.bf16.msra.mxu0 0
    %1072 = vmatprep.subr.bf16.mxu0 0
    %1073 = vmatpush1.bf16.msra.mxu0 0
    %1074 = vmatprep.subr.bf16.mxu0 0
    %1075 = vmatpush1.bf16.msra.mxu0 0
    %1076 = vmatprep.subr.bf16.mxu0 0
    %1077 = vmatpush1.bf16.msra.mxu0 0
    %1078 = vmatprep.subr.bf16.mxu0 0
    %1079 = vmatpush1.bf16.msra.mxu0 0
    %1080 = vmatprep.subr.bf16.mxu0 0
    %1081 = vmatpush1.bf16.msra.mxu0 0
    %1082 = vmatprep.subr.bf16.mxu0 0
    %1083 = vmatpush1.bf16.msra.mxu0 0
    %1084 = vmatprep.mubr.bf16.mxu0 0
    %1085 = vmatmul.mubr.bf16.gmra.mrb[0].mxu0 %v927
    %v1086 = vpop.f32.mrb[0].mxu0
    %v1087 = vadd.f32 %v296, %v1086
    %v1088 = vpop.f32.mrb[0].mxu0
    %v1089 = vadd.f32 %v300, %v1088
    %v1090 = vpop.f32.mrb[0].mxu0
    %v1091 = vpop.f32.mrb[0].mxu0
    %1092 = vdwg.mxu0
    %1093 = vmatprep.subr.bf16.mxu0 %v727
    %1094 = vmatpush1.bf16.msra.mxu0 %v726
    %1095 = vmatprep.subr.bf16.mxu0 %v753
    %1096 = vmatpush1.bf16.msra.mxu0 %v752
    %1097 = vmatprep.subr.bf16.mxu0 %v779
    %1098 = vmatpush1.bf16.msra.mxu0 %v778
    %1099 = vmatprep.subr.bf16.mxu0 %v805
    %1100 = vmatpush1.bf16.msra.mxu0 %v804
    %1101 = vmatprep.subr.bf16.mxu0 0
    %1102 = vmatpush1.bf16.msra.mxu0 0
    %1103 = vmatprep.subr.bf16.mxu0 0
    %1104 = vmatpush1.bf16.msra.mxu0 0
    %1105 = vmatprep.subr.bf16.mxu0 0
    %1106 = vmatpush1.bf16.msra.mxu0 0
    %1107 = vmatprep.subr.bf16.mxu0 0
    %1108 = vmatpush1.bf16.msra.mxu0 0
    %1109 = vmatprep.subr.bf16.mxu0 0
    %1110 = vmatpush1.bf16.msra.mxu0 0
    %1111 = vmatprep.subr.bf16.mxu0 0
    %1112 = vmatpush1.bf16.msra.mxu0 0
    %1113 = vmatprep.subr.bf16.mxu0 0
    %1114 = vmatpush1.bf16.msra.mxu0 0
    %1115 = vmatprep.subr.bf16.mxu0 0
    %1116 = vmatpush1.bf16.msra.mxu0 0
    %1117 = vmatprep.subr.bf16.mxu0 0
    %1118 = vmatpush1.bf16.msra.mxu0 0
    %1119 = vmatprep.subr.bf16.mxu0 0
    %1120 = vmatpush1.bf16.msra.mxu0 0
    %1121 = vmatprep.subr.bf16.mxu0 0
    %1122 = vmatpush1.bf16.msra.mxu0 0
    %1123 = vmatprep.subr.bf16.mxu0 0
    %1124 = vmatpush1.bf16.msra.mxu0 0
    %1125 = vmatprep.mubr.bf16.mxu0 0
    %1126 = vmatmul.mubr.bf16.gmra.mrb[0].mxu0 %v927
    %v1127 = vpop.f32.mrb[0].mxu0
    %v1128 = vadd.f32 %v304, %v1127
    %v1129 = vpop.f32.mrb[0].mxu0
    %v1130 = vadd.f32 %v308, %v1129
    %v1131 = vpop.f32.mrb[0].mxu0
    %v1132 = vpop.f32.mrb[0].mxu0
    %1133 = vdwg.mxu0
    %1134 = vmatprep.subr.bf16.mxu0 %v729
    %1135 = vmatpush1.bf16.msra.mxu0 %v728
    %1136 = vmatprep.subr.bf16.mxu0 %v755
    %1137 = vmatpush1.bf16.msra.mxu0 %v754
    %1138 = vmatprep.subr.bf16.mxu0 %v781
    %1139 = vmatpush1.bf16.msra.mxu0 %v780
    %1140 = vmatprep.subr.bf16.mxu0 %v807
    %1141 = vmatpush1.bf16.msra.mxu0 %v806
    %1142 = vmatprep.subr.bf16.mxu0 0
    %1143 = vmatpush1.bf16.msra.mxu0 0
    %1144 = vmatprep.subr.bf16.mxu0 0
    %1145 = vmatpush1.bf16.msra.mxu0 0
    %1146 = vmatprep.subr.bf16.mxu0 0
    %1147 = vmatpush1.bf16.msra.mxu0 0
    %1148 = vmatprep.subr.bf16.mxu0 0
    %1149 = vmatpush1.bf16.msra.mxu0 0
    %1150 = vmatprep.subr.bf16.mxu0 0
    %1151 = vmatpush1.bf16.msra.mxu0 0
    %1152 = vmatprep.subr.bf16.mxu0 0
    %1153 = vmatpush1.bf16.msra.mxu0 0
    %1154 = vmatprep.subr.bf16.mxu0 0
    %1155 = vmatpush1.bf16.msra.mxu0 0
    %1156 = vmatprep.subr.bf16.mxu0 0
    %1157 = vmatpush1.bf16.msra.mxu0 0
    %1158 = vmatprep.subr.bf16.mxu0 0
    %1159 = vmatpush1.bf16.msra.mxu0 0
    %1160 = vmatprep.subr.bf16.mxu0 0
    %1161 = vmatpush1.bf16.msra.mxu0 0
    %1162 = vmatprep.subr.bf16.mxu0 0
    %1163 = vmatpush1.bf16.msra.mxu0 0
    %1164 = vmatprep.subr.bf16.mxu0 0
    %1165 = vmatpush1.bf16.msra.mxu0 0
    %1166 = vmatprep.mubr.bf16.mxu0 0
    %1167 = vmatmul.mubr.bf16.gmra.mrb[0].mxu0 %v927
    %v1168 = vpop.f32.mrb[0].mxu0
    %v1169 = vadd.f32 %v312, %v1168
    %v1170 = vpop.f32.mrb[0].mxu0
    %v1171 = vadd.f32 %v316, %v1170
    %v1172 = vpop.f32.mrb[0].mxu0
    %v1173 = vpop.f32.mrb[0].mxu0
    %1174 = vdwg.mxu0
    %1175 = vmatprep.subr.bf16.mxu0 %v731
    %1176 = vmatpush1.bf16.msra.mxu0 %v730
    %1177 = vmatprep.subr.bf16.mxu0 %v757
    %1178 = vmatpush1.bf16.msra.mxu0 %v756
    %1179 = vmatprep.subr.bf16.mxu0 %v783
    %1180 = vmatpush1.bf16.msra.mxu0 %v782
    %1181 = vmatprep.subr.bf16.mxu0 %v809
    %1182 = vmatpush1.bf16.msra.mxu0 %v808
    %1183 = vmatprep.subr.bf16.mxu0 0
    %1184 = vmatpush1.bf16.msra.mxu0 0
    %1185 = vmatprep.subr.bf16.mxu0 0
    %1186 = vmatpush1.bf16.msra.mxu0 0
    %1187 = vmatprep.subr.bf16.mxu0 0
    %1188 = vmatpush1.bf16.msra.mxu0 0
    %1189 = vmatprep.subr.bf16.mxu0 0
    %1190 = vmatpush1.bf16.msra.mxu0 0
    %1191 = vmatprep.subr.bf16.mxu0 0
    %1192 = vmatpush1.bf16.msra.mxu0 0
    %1193 = vmatprep.subr.bf16.mxu0 0
    %1194 = vmatpush1.bf16.msra.mxu0 0
    %1195 = vmatprep.subr.bf16.mxu0 0
    %1196 = vmatpush1.bf16.msra.mxu0 0
    %1197 = vmatprep.subr.bf16.mxu0 0
    %1198 = vmatpush1.bf16.msra.mxu0 0
    %1199 = vmatprep.subr.bf16.mxu0 0
    %1200 = vmatpush1.bf16.msra.mxu0 0
    %1201 = vmatprep.subr.bf16.mxu0 0
    %1202 = vmatpush1.bf16.msra.mxu0 0
    %1203 = vmatprep.subr.bf16.mxu0 0
    %1204 = vmatpush1.bf16.msra.mxu0 0
    %1205 = vmatprep.subr.bf16.mxu0 0
    %1206 = vmatpush1.bf16.msra.mxu0 0
    %1207 = vmatprep.mubr.bf16.mxu0 0
    %1208 = vmatmul.mubr.bf16.gmra.mrb[0].mxu0 %v927
    %v1209 = vpop.f32.mrb[0].mxu0
    %v1210 = vadd.f32 %v320, %v1209
    %v1211 = vpop.f32.mrb[0].mxu0
    %v1212 = vadd.f32 %v324, %v1211
    %v1213 = vpop.f32.mrb[0].mxu0
    %v1214 = vpop.f32.mrb[0].mxu0
    %1215 = vdwg.mxu0
    %1216 = vmatprep.subr.bf16.mxu0 %v733
    %1217 = vmatpush1.bf16.msra.mxu0 %v732
    %1218 = vmatprep.subr.bf16.mxu0 %v759
    %1219 = vmatpush1.bf16.msra.mxu0 %v758
    %1220 = vmatprep.subr.bf16.mxu0 %v785
    %1221 = vmatpush1.bf16.msra.mxu0 %v784
    %1222 = vmatprep.subr.bf16.mxu0 %v811
    %1223 = vmatpush1.bf16.msra.mxu0 %v810
    %1224 = vmatprep.subr.bf16.mxu0 0
    %1225 = vmatpush1.bf16.msra.mxu0 0
    %1226 = vmatprep.subr.bf16.mxu0 0
    %1227 = vmatpush1.bf16.msra.mxu0 0
    %1228 = vmatprep.subr.bf16.mxu0 0
    %1229 = vmatpush1.bf16.msra.mxu0 0
    %1230 = vmatprep.subr.bf16.mxu0 0
    %1231 = vmatpush1.bf16.msra.mxu0 0
    %1232 = vmatprep.subr.bf16.mxu0 0
    %1233 = vmatpush1.bf16.msra.mxu0 0
    %1234 = vmatprep.subr.bf16.mxu0 0
    %1235 = vmatpush1.bf16.msra.mxu0 0
    %1236 = vmatprep.subr.bf16.mxu0 0
    %1237 = vmatpush1.bf16.msra.mxu0 0
    %1238 = vmatprep.subr.bf16.mxu0 0
    %1239 = vmatpush1.bf16.msra.mxu0 0
    %1240 = vmatprep.subr.bf16.mxu0 0
    %1241 = vmatpush1.bf16.msra.mxu0 0
    %1242 = vmatprep.subr.bf16.mxu0 0
    %1243 = vmatpush1.bf16.msra.mxu0 0
    %1244 = vmatprep.subr.bf16.mxu0 0
    %1245 = vmatpush1.bf16.msra.mxu0 0
    %1246 = vmatprep.subr.bf16.mxu0 0
    %1247 = vmatpush1.bf16.msra.mxu0 0
    %1248 = vmatprep.mubr.bf16.mxu0 0
    %1249 = vmatmul.mubr.bf16.gmra.mrb[0].mxu0 %v927
    %v1250 = vpop.f32.mrb[0].mxu0
    %v1251 = vadd.f32 %v328, %v1250
    %v1252 = vpop.f32.mrb[0].mxu0
    %v1253 = vadd.f32 %v332, %v1252
    %v1254 = vpop.f32.mrb[0].mxu0
    %v1255 = vpop.f32.mrb[0].mxu0
    %1256 = vdwg.mxu0
    %1257 = vmatprep.subr.bf16.mxu0 %v735
    %1258 = vmatpush1.bf16.msra.mxu0 %v734
    %1259 = vmatprep.subr.bf16.mxu0 %v761
    %1260 = vmatpush1.bf16.msra.mxu0 %v760
    %1261 = vmatprep.subr.bf16.mxu0 %v787
    %1262 = vmatpush1.bf16.msra.mxu0 %v786
    %1263 = vmatprep.subr.bf16.mxu0 %v813
    %1264 = vmatpush1.bf16.msra.mxu0 %v812
    %1265 = vmatprep.subr.bf16.mxu0 0
    %1266 = vmatpush1.bf16.msra.mxu0 0
    %1267 = vmatprep.subr.bf16.mxu0 0
    %1268 = vmatpush1.bf16.msra.mxu0 0
    %1269 = vmatprep.subr.bf16.mxu0 0
    %1270 = vmatpush1.bf16.msra.mxu0 0
    %1271 = vmatprep.subr.bf16.mxu0 0
    %1272 = vmatpush1.bf16.msra.mxu0 0
    %1273 = vmatprep.subr.bf16.mxu0 0
    %1274 = vmatpush1.bf16.msra.mxu0 0
    %1275 = vmatprep.subr.bf16.mxu0 0
    %1276 = vmatpush1.bf16.msra.mxu0 0
    %1277 = vmatprep.subr.bf16.mxu0 0
    %1278 = vmatpush1.bf16.msra.mxu0 0
    %1279 = vmatprep.subr.bf16.mxu0 0
    %1280 = vmatpush1.bf16.msra.mxu0 0
    %1281 = vmatprep.subr.bf16.mxu0 0
    %1282 = vmatpush1.bf16.msra.mxu0 0
    %1283 = vmatprep.subr.bf16.mxu0 0
    %1284 = vmatpush1.bf16.msra.mxu0 0
    %1285 = vmatprep.subr.bf16.mxu0 0
    %1286 = vmatpush1.bf16.msra.mxu0 0
    %1287 = vmatprep.subr.bf16.mxu0 0
    %1288 = vmatpush1.bf16.msra.mxu0 0
    %1289 = vmatprep.mubr.bf16.mxu0 0
    %1290 = vmatmul.mubr.bf16.gmra.mrb[0].mxu0 %v927
    %v1291 = vpop.f32.mrb[0].mxu0
    %v1292 = vadd.f32 %v336, %v1291
    %v1293 = vpop.f32.mrb[0].mxu0
    %v1294 = vadd.f32 %v340, %v1293
    %v1295 = vpop.f32.mrb[0].mxu0
    %v1296 = vpop.f32.mrb[0].mxu0
    %1297 = vdwg.mxu0
    %1298 = vmatprep.subr.bf16.mxu0 %v737
    %1299 = vmatpush1.bf16.msra.mxu0 %v736
    %1300 = vmatprep.subr.bf16.mxu0 %v763
    %1301 = vmatpush1.bf16.msra.mxu0 %v762
    %1302 = vmatprep.subr.bf16.mxu0 %v789
    %1303 = vmatpush1.bf16.msra.mxu0 %v788
    %1304 = vmatprep.subr.bf16.mxu0 %v815
    %1305 = vmatpush1.bf16.msra.mxu0 %v814
    %1306 = vmatprep.subr.bf16.mxu0 0
    %1307 = vmatpush1.bf16.msra.mxu0 0
    %1308 = vmatprep.subr.bf16.mxu0 0
    %1309 = vmatpush1.bf16.msra.mxu0 0
    %1310 = vmatprep.subr.bf16.mxu0 0
    %1311 = vmatpush1.bf16.msra.mxu0 0
    %1312 = vmatprep.subr.bf16.mxu0 0
    %1313 = vmatpush1.bf16.msra.mxu0 0
    %1314 = vmatprep.subr.bf16.mxu0 0
    %1315 = vmatpush1.bf16.msra.mxu0 0
    %1316 = vmatprep.subr.bf16.mxu0 0
    %1317 = vmatpush1.bf16.msra.mxu0 0
    %1318 = vmatprep.subr.bf16.mxu0 0
    %1319 = vmatpush1.bf16.msra.mxu0 0
    %1320 = vmatprep.subr.bf16.mxu0 0
    %1321 = vmatpush1.bf16.msra.mxu0 0
    %1322 = vmatprep.subr.bf16.mxu0 0
    %1323 = vmatpush1.bf16.msra.mxu0 0
    %1324 = vmatprep.subr.bf16.mxu0 0
    %1325 = vmatpush1.bf16.msra.mxu0 0
    %1326 = vmatprep.subr.bf16.mxu0 0
    %1327 = vmatpush1.bf16.msra.mxu0 0
    %1328 = vmatprep.subr.bf16.mxu0 0
    %1329 = vmatpush1.bf16.msra.mxu0 0
    %1330 = vmatprep.mubr.bf16.mxu0 0
    %1331 = vmatmul.mubr.bf16.gmra.mrb[0].mxu0 %v927
    %v1332 = vpop.f32.mrb[0].mxu0
    %v1333 = vadd.f32 %v344, %v1332
    %v1334 = vpop.f32.mrb[0].mxu0
    %v1335 = vadd.f32 %v348, %v1334
    %v1336 = vpop.f32.mrb[0].mxu0
    %v1337 = vpop.f32.mrb[0].mxu0
    %1338 = vdwg.mxu0
    %1339 = vmatprep.subr.bf16.mxu0 %v739
    %1340 = vmatpush1.bf16.msra.mxu0 %v738
    %1341 = vmatprep.subr.bf16.mxu0 %v765
    %1342 = vmatpush1.bf16.msra.mxu0 %v764
    %1343 = vmatprep.subr.bf16.mxu0 %v791
    %1344 = vmatpush1.bf16.msra.mxu0 %v790
    %1345 = vmatprep.subr.bf16.mxu0 %v817
    %1346 = vmatpush1.bf16.msra.mxu0 %v816
    %1347 = vmatprep.subr.bf16.mxu0 0
    %1348 = vmatpush1.bf16.msra.mxu0 0
    %1349 = vmatprep.subr.bf16.mxu0 0
    %1350 = vmatpush1.bf16.msra.mxu0 0
    %1351 = vmatprep.subr.bf16.mxu0 0
    %1352 = vmatpush1.bf16.msra.mxu0 0
    %1353 = vmatprep.subr.bf16.mxu0 0
    %1354 = vmatpush1.bf16.msra.mxu0 0
    %1355 = vmatprep.subr.bf16.mxu0 0
    %1356 = vmatpush1.bf16.msra.mxu0 0
    %1357 = vmatprep.subr.bf16.mxu0 0
    %1358 = vmatpush1.bf16.msra.mxu0 0
    %1359 = vmatprep.subr.bf16.mxu0 0
    %1360 = vmatpush1.bf16.msra.mxu0 0
    %1361 = vmatprep.subr.bf16.mxu0 0
    %1362 = vmatpush1.bf16.msra.mxu0 0
    %1363 = vmatprep.subr.bf16.mxu0 0
    %1364 = vmatpush1.bf16.msra.mxu0 0
    %1365 = vmatprep.subr.bf16.mxu0 0
    %1366 = vmatpush1.bf16.msra.mxu0 0
    %1367 = vmatprep.subr.bf16.mxu0 0
    %1368 = vmatpush1.bf16.msra.mxu0 0
    %1369 = vmatprep.subr.bf16.mxu0 0
    %1370 = vmatpush1.bf16.msra.mxu0 0
    %1371 = vmatprep.mubr.bf16.mxu0 0
    %1372 = vmatmul.mubr.bf16.gmra.mrb[0].mxu0 %v927
    %v1373 = vpop.f32.mrb[0].mxu0
    %v1374 = vadd.f32 %v352, %v1373
    %v1375 = vpop.f32.mrb[0].mxu0
    %v1376 = vadd.f32 %v356, %v1375
    %v1377 = vpop.f32.mrb[0].mxu0
    %v1378 = vpop.f32.mrb[0].mxu0
    %1379 = vdwg.mxu0
    %1380 = vmatprep.subr.bf16.mxu0 %v741
    %1381 = vmatpush1.bf16.msra.mxu0 %v740
    %1382 = vmatprep.subr.bf16.mxu0 %v767
    %1383 = vmatpush1.bf16.msra.mxu0 %v766
    %1384 = vmatprep.subr.bf16.mxu0 %v793
    %1385 = vmatpush1.bf16.msra.mxu0 %v792
    %1386 = vmatprep.subr.bf16.mxu0 %v819
    %1387 = vmatpush1.bf16.msra.mxu0 %v818
    %1388 = vmatprep.subr.bf16.mxu0 0
    %1389 = vmatpush1.bf16.msra.mxu0 0
    %1390 = vmatprep.subr.bf16.mxu0 0
    %1391 = vmatpush1.bf16.msra.mxu0 0
    %1392 = vmatprep.subr.bf16.mxu0 0
    %1393 = vmatpush1.bf16.msra.mxu0 0
    %1394 = vmatprep.subr.bf16.mxu0 0
    %1395 = vmatpush1.bf16.msra.mxu0 0
    %1396 = vmatprep.subr.bf16.mxu0 0
    %1397 = vmatpush1.bf16.msra.mxu0 0
    %1398 = vmatprep.subr.bf16.mxu0 0
    %1399 = vmatpush1.bf16.msra.mxu0 0
    %1400 = vmatprep.subr.bf16.mxu0 0
    %1401 = vmatpush1.bf16.msra.mxu0 0
    %1402 = vmatprep.subr.bf16.mxu0 0
    %1403 = vmatpush1.bf16.msra.mxu0 0
    %1404 = vmatprep.subr.bf16.mxu0 0
    %1405 = vmatpush1.bf16.msra.mxu0 0
    %1406 = vmatprep.subr.bf16.mxu0 0
    %1407 = vmatpush1.bf16.msra.mxu0 0
    %1408 = vmatprep.subr.bf16.mxu0 0
    %1409 = vmatpush1.bf16.msra.mxu0 0
    %1410 = vmatprep.subr.bf16.mxu0 0
    %1411 = vmatpush1.bf16.msra.mxu0 0
    %1412 = vmatprep.mubr.bf16.mxu0 0
    %1413 = vmatmul.mubr.bf16.gmra.mrb[0].mxu0 %v927
    %v1414 = vpop.f32.mrb[0].mxu0
    %v1415 = vadd.f32 %v360, %v1414
    %v1416 = vpop.f32.mrb[0].mxu0
    %v1417 = vadd.f32 %v364, %v1416
    %v1418 = vpop.f32.mrb[0].mxu0
    %v1419 = vpop.f32.mrb[0].mxu0
    %1420 = vdwg.mxu0
    %1421 = vmatprep.subr.bf16.mxu0 %v743
    %1422 = vmatpush1.bf16.msra.mxu0 %v742
    %1423 = vmatprep.subr.bf16.mxu0 %v769
    %1424 = vmatpush1.bf16.msra.mxu0 %v768
    %1425 = vmatprep.subr.bf16.mxu0 %v795
    %1426 = vmatpush1.bf16.msra.mxu0 %v794
    %1427 = vmatprep.subr.bf16.mxu0 %v821
    %1428 = vmatpush1.bf16.msra.mxu0 %v820
    %1429 = vmatprep.subr.bf16.mxu0 0
    %1430 = vmatpush1.bf16.msra.mxu0 0
    %1431 = vmatprep.subr.bf16.mxu0 0
    %1432 = vmatpush1.bf16.msra.mxu0 0
    %1433 = vmatprep.subr.bf16.mxu0 0
    %1434 = vmatpush1.bf16.msra.mxu0 0
    %1435 = vmatprep.subr.bf16.mxu0 0
    %1436 = vmatpush1.bf16.msra.mxu0 0
    %1437 = vmatprep.subr.bf16.mxu0 0
    %1438 = vmatpush1.bf16.msra.mxu0 0
    %1439 = vmatprep.subr.bf16.mxu0 0
    %1440 = vmatpush1.bf16.msra.mxu0 0
    %1441 = vmatprep.subr.bf16.mxu0 0
    %1442 = vmatpush1.bf16.msra.mxu0 0
    %1443 = vmatprep.subr.bf16.mxu0 0
    %1444 = vmatpush1.bf16.msra.mxu0 0
    %1445 = vmatprep.subr.bf16.mxu0 0
    %1446 = vmatpush1.bf16.msra.mxu0 0
    %1447 = vmatprep.subr.bf16.mxu0 0
    %1448 = vmatpush1.bf16.msra.mxu0 0
    %1449 = vmatprep.subr.bf16.mxu0 0
    %1450 = vmatpush1.bf16.msra.mxu0 0
    %1451 = vmatprep.subr.bf16.mxu0 0
    %1452 = vmatpush1.bf16.msra.mxu0 0
    %1453 = vmatprep.mubr.bf16.mxu0 0
    %1454 = vmatmul.mubr.bf16.gmra.mrb[0].mxu0 %v927
    %v1455 = vpop.f32.mrb[0].mxu0
    %v1456 = vadd.f32 %v368, %v1455
    %v1457 = vpop.f32.mrb[0].mxu0
    %v1458 = vadd.f32 %v372, %v1457
    %v1459 = vpop.f32.mrb[0].mxu0
    %v1460 = vpop.f32.mrb[0].mxu0
    %1461 = vdwg.mxu0
    %v1462 = vmax.f32 %v964, 0.0
    %v1463 = vmax.f32 %v966, 0.0
    %v1464 = vmax.f32 %v1005, 0.0
    %v1465 = vmax.f32 %v1007, 0.0
    %v1466 = vmax.f32 %v1046, 0.0
    %v1467 = vmax.f32 %v1048, 0.0
    %v1468 = vmax.f32 %v1087, 0.0
    %v1469 = vmax.f32 %v1089, 0.0
    %v1470 = vmax.f32 %v1128, 0.0
    %v1471 = vmax.f32 %v1130, 0.0
    %v1472 = vmax.f32 %v1169, 0.0
    %v1473 = vmax.f32 %v1171, 0.0
    %v1474 = vmax.f32 %v1210, 0.0
    %v1475 = vmax.f32 %v1212, 0.0
    %v1476 = vmax.f32 %v1251, 0.0
    %v1477 = vmax.f32 %v1253, 0.0
    %v1478 = vmax.f32 %v1292, 0.0
    %v1479 = vmax.f32 %v1294, 0.0
    %v1480 = vmax.f32 %v1333, 0.0
    %v1481 = vmax.f32 %v1335, 0.0
    %v1482 = vmax.f32 %v1374, 0.0
    %v1483 = vmax.f32 %v1376, 0.0
    %v1484 = vmax.f32 %v1415, 0.0
    %v1485 = vmax.f32 %v1417, 0.0
    %v1486 = vmax.f32 %v1456, 0.0
    %v1487 = vmax.f32 %v1458, 0.0
    %s1488 = scalar_lea.vmem %s3, 1
    %v1489 = vld [vmem:[%s1488] ss:$8 sm:$0xf]
    %v1490 = vld [vmem:[%s1488] ss:$8 sm:$0xf0]
    %v1491 = vor.u32 %v1489, %v1490
    %s1492 = scalar_lea.vmem %s3, 65
    %v1493 = vld [vmem:[%s1492] ss:$8 sm:$0xf]
    %v1494 = vld [vmem:[%s1492] ss:$8 sm:$0xf0]
    %v1495 = vor.u32 %v1493, %v1494
    %s1496 = scalar_lea.vmem %s3, 129
    %v1497 = vld [vmem:[%s1496] ss:$8 sm:$0xf]
    %v1498 = vld [vmem:[%s1496] ss:$8 sm:$0xf0]
    %v1499 = vor.u32 %v1497, %v1498
    %s1500 = scalar_lea.vmem %s3, 193
    %v1501 = vld [vmem:[%s1500] ss:$8 sm:$0x3]
    %v1502 = vld [vmem:[%s3 + $0x2] ss:$0 sm:$0xff]
    %v1507 = vlaneseq
    %v1508 = vshrl.u32 %v1507, 7
    %v1509 = vsub.s32 0, %v1508
    %v1510 = vrot.slane %v1491, %v1509
    %v1511 = vlaneseq
    %v1512 = vshrl.u32 %v1511, 7
    %v1513 = vsub.s32 1, %v1512
    %v1514 = vrot.slane %v1491, %v1513
    %v1515 = vlaneseq
    %v1516 = vshrl.u32 %v1515, 7
    %v1517 = vsub.s32 2, %v1516
    %v1518 = vrot.slane %v1491, %v1517
    %v1519 = vlaneseq
    %v1520 = vshrl.u32 %v1519, 7
    %v1521 = vsub.s32 3, %v1520
    %v1522 = vrot.slane %v1491, %v1521
    %v1523 = vlaneseq
    %v1524 = vshrl.u32 %v1523, 7
    %v1525 = vsub.s32 4, %v1524
    %v1526 = vrot.slane %v1491, %v1525
    %v1527 = vlaneseq
    %v1528 = vshrl.u32 %v1527, 7
    %v1529 = vsub.s32 5, %v1528
    %v1530 = vrot.slane %v1491, %v1529
    %v1531 = vlaneseq
    %v1532 = vshrl.u32 %v1531, 7
    %v1533 = vsub.s32 6, %v1532
    %v1534 = vrot.slane %v1491, %v1533
    %v1535 = vlaneseq
    %v1536 = vshrl.u32 %v1535, 7
    %v1537 = vsub.s32 7, %v1536
    %v1538 = vrot.slane %v1491, %v1537
    %v1539 = vlaneseq
    %v1540 = vshrl.u32 %v1539, 7
    %v1541 = vsub.s32 0, %v1540
    %v1542 = vrot.slane %v1495, %v1541
    %v1543 = vlaneseq
    %v1544 = vshrl.u32 %v1543, 7
    %v1545 = vsub.s32 1, %v1544
    %v1546 = vrot.slane %v1495, %v1545
    %v1547 = vlaneseq
    %v1548 = vshrl.u32 %v1547, 7
    %v1549 = vsub.s32 2, %v1548
    %v1550 = vrot.slane %v1495, %v1549
    %v1551 = vlaneseq
    %v1552 = vshrl.u32 %v1551, 7
    %v1553 = vsub.s32 3, %v1552
    %v1554 = vrot.slane %v1495, %v1553
    %v1555 = vlaneseq
    %v1556 = vshrl.u32 %v1555, 7
    %v1557 = vsub.s32 4, %v1556
    %v1558 = vrot.slane %v1495, %v1557
    %v1559 = vlaneseq
    %v1560 = vshrl.u32 %v1559, 7
    %v1561 = vsub.s32 5, %v1560
    %v1562 = vrot.slane %v1495, %v1561
    %v1563 = vlaneseq
    %v1564 = vshrl.u32 %v1563, 7
    %v1565 = vsub.s32 6, %v1564
    %v1566 = vrot.slane %v1495, %v1565
    %v1567 = vlaneseq
    %v1568 = vshrl.u32 %v1567, 7
    %v1569 = vsub.s32 7, %v1568
    %v1570 = vrot.slane %v1495, %v1569
    %v1571 = vlaneseq
    %v1572 = vshrl.u32 %v1571, 7
    %v1573 = vsub.s32 0, %v1572
    %v1574 = vrot.slane %v1499, %v1573
    %v1575 = vlaneseq
    %v1576 = vshrl.u32 %v1575, 7
    %v1577 = vsub.s32 1, %v1576
    %v1578 = vrot.slane %v1499, %v1577
    %v1579 = vlaneseq
    %v1580 = vshrl.u32 %v1579, 7
    %v1581 = vsub.s32 2, %v1580
    %v1582 = vrot.slane %v1499, %v1581
    %v1583 = vlaneseq
    %v1584 = vshrl.u32 %v1583, 7
    %v1585 = vsub.s32 3, %v1584
    %v1586 = vrot.slane %v1499, %v1585
    %v1587 = vlaneseq
    %v1588 = vshrl.u32 %v1587, 7
    %v1589 = vsub.s32 4, %v1588
    %v1590 = vrot.slane %v1499, %v1589
    %v1591 = vlaneseq
    %v1592 = vshrl.u32 %v1591, 7
    %v1593 = vsub.s32 5, %v1592
    %v1594 = vrot.slane %v1499, %v1593
    %v1595 = vlaneseq
    %v1596 = vshrl.u32 %v1595, 7
    %v1597 = vsub.s32 6, %v1596
    %v1598 = vrot.slane %v1499, %v1597
    %v1599 = vlaneseq
    %v1600 = vshrl.u32 %v1599, 7
    %v1601 = vsub.s32 7, %v1600
    %v1602 = vrot.slane %v1499, %v1601
    %v1603 = vlaneseq
    %v1604 = vshrl.u32 %v1603, 7
    %v1605 = vsub.s32 0, %v1604
    %v1606 = vrot.slane %v1501, %v1605
    %v1607 = vlaneseq
    %v1608 = vshrl.u32 %v1607, 7
    %v1609 = vsub.s32 1, %v1608
    %v1610 = vrot.slane %v1501, %v1609
    %v1637 = vmul.f32 %v1462, %v1510
    %v1638 = vmul.f32 %v1463, %v1514
    %v1639 = vmul.f32 %v1464, %v1518
    %v1640 = vmul.f32 %v1465, %v1522
    %v1641 = vmul.f32 %v1466, %v1526
    %v1642 = vmul.f32 %v1467, %v1530
    %v1643 = vmul.f32 %v1468, %v1534
    %v1644 = vmul.f32 %v1469, %v1538
    %v1645 = vmul.f32 %v1470, %v1542
    %v1646 = vmul.f32 %v1471, %v1546
    %v1647 = vmul.f32 %v1472, %v1550
    %v1648 = vmul.f32 %v1473, %v1554
    %v1649 = vmul.f32 %v1474, %v1558
    %v1650 = vmul.f32 %v1475, %v1562
    %v1651 = vmul.f32 %v1476, %v1566
    %v1652 = vmul.f32 %v1477, %v1570
    %v1653 = vmul.f32 %v1478, %v1574
    %v1654 = vmul.f32 %v1479, %v1578
    %v1655 = vmul.f32 %v1480, %v1582
    %v1656 = vmul.f32 %v1481, %v1586
    %v1657 = vmul.f32 %v1482, %v1590
    %v1658 = vmul.f32 %v1483, %v1594
    %v1659 = vmul.f32 %v1484, %v1598
    %v1660 = vmul.f32 %v1485, %v1602
    %v1661 = vmul.f32 %v1486, %v1606
    %v1662 = vmul.f32 %v1487, %v1610
    %1663 = vst [vmem:[#allocation2] sm:$0x3] %v1502
    %vm1664 = vcmask 1041408
    %v1665 = vsel %vm1664, %v1637, 0.0
    %v1666 = vsel %vm1664, %v1638, 0.0
    %v1667 = vadd.f32 %v1665, %v1666
    %1668 = vadd.xlane.f32.xlu0 %v1667
    %v1669 = vpop.xlane.xlu0 %1668
    %v1670 = vadd.f32 %v1669, %v1502
    %vm1671 = vcmask 1024
    %1672 = vst.msk [vmem:[#allocation2] sm:$0x3] %vm1671, %v1670
    %v1673 = vsel %vm1664, %v1639, 0.0
    %v1674 = vsel %vm1664, %v1640, 0.0
    %v1675 = vadd.f32 %v1673, %v1674
    %1676 = vadd.xlane.f32.xlu0 %v1675
    %v1677 = vpop.xlane.xlu0 %1676
    %v1678 = vadd.f32 %v1677, %v1502
    %vm1679 = vcmask 9224
    %1680 = vst.msk [vmem:[#allocation2] sm:$0x3] %vm1679, %v1678
    %v1681 = vsel %vm1664, %v1641, 0.0
    %v1682 = vsel %vm1664, %v1642, 0.0
    %v1683 = vadd.f32 %v1681, %v1682
    %1684 = vadd.xlane.f32.xlu0 %v1683
    %v1685 = vpop.xlane.xlu0 %1684
    %v1686 = vadd.f32 %v1685, %v1502
    %vm1687 = vcmask 17424
    %1688 = vst.msk [vmem:[#allocation2] sm:$0x3] %vm1687, %v1686
    %v1689 = vsel %vm1664, %v1643, 0.0
    %v1690 = vsel %vm1664, %v1644, 0.0
    %v1691 = vadd.f32 %v1689, %v1690
    %1692 = vadd.xlane.f32.xlu0 %v1691
    %v1693 = vpop.xlane.xlu0 %1692
    %v1694 = vadd.f32 %v1693, %v1502
    %vm1695 = vcmask 25624
    %1696 = vst.msk [vmem:[#allocation2] sm:$0x3] %vm1695, %v1694
    %v1697 = vsel %vm1664, %v1645, 0.0
    %v1698 = vsel %vm1664, %v1646, 0.0
    %v1699 = vadd.f32 %v1697, %v1698
    %1700 = vadd.xlane.f32.xlu0 %v1699
    %v1701 = vpop.xlane.xlu0 %1700
    %v1702 = vadd.f32 %v1701, %v1502
    %vm1703 = vcmask 33824
    %1704 = vst.msk [vmem:[#allocation2] sm:$0x3] %vm1703, %v1702
    %v1705 = vsel %vm1664, %v1647, 0.0
    %v1706 = vsel %vm1664, %v1648, 0.0
    %v1707 = vadd.f32 %v1705, %v1706
    %1708 = vadd.xlane.f32.xlu0 %v1707
    %v1709 = vpop.xlane.xlu0 %1708
    %v1710 = vadd.f32 %v1709, %v1502
    %vm1711 = vcmask 42024
    %1712 = vst.msk [vmem:[#allocation2] sm:$0x3] %vm1711, %v1710
    %v1713 = vsel %vm1664, %v1649, 0.0
    %v1714 = vsel %vm1664, %v1650, 0.0
    %v1715 = vadd.f32 %v1713, %v1714
    %1716 = vadd.xlane.f32.xlu0 %v1715
    %v1717 = vpop.xlane.xlu0 %1716
    %v1718 = vadd.f32 %v1717, %v1502
    %vm1719 = vcmask 50224
    %1720 = vst.msk [vmem:[#allocation2] sm:$0x3] %vm1719, %v1718
    %v1721 = vsel %vm1664, %v1651, 0.0
    %v1722 = vsel %vm1664, %v1652, 0.0
    %v1723 = vadd.f32 %v1721, %v1722
    %1724 = vadd.xlane.f32.xlu0 %v1723
    %v1725 = vpop.xlane.xlu0 %1724
    %v1726 = vadd.f32 %v1725, %v1502
    %vm1727 = vcmask 58424
    %1728 = vst.msk [vmem:[#allocation2] sm:$0x3] %vm1727, %v1726
    %v1729 = vsel %vm1664, %v1653, 0.0
    %v1730 = vsel %vm1664, %v1654, 0.0
    %v1731 = vadd.f32 %v1729, %v1730
    %1732 = vadd.xlane.f32.xlu0 %v1731
    %v1733 = vpop.xlane.xlu0 %1732
    %v1734 = vadd.f32 %v1733, %v1502
    %vm1735 = vcmask 66624
    %1736 = vst.msk [vmem:[#allocation2] sm:$0x3] %vm1735, %v1734
    %v1737 = vsel %vm1664, %v1655, 0.0
    %v1738 = vsel %vm1664, %v1656, 0.0
    %v1739 = vadd.f32 %v1737, %v1738
    %1740 = vadd.xlane.f32.xlu0 %v1739
    %v1741 = vpop.xlane.xlu0 %1740
    %v1742 = vadd.f32 %v1741, %v1502
    %vm1743 = vcmask 74824
    %1744 = vst.msk [vmem:[#allocation2] sm:$0x3] %vm1743, %v1742
    %v1745 = vsel %vm1664, %v1657, 0.0
    %v1746 = vsel %vm1664, %v1658, 0.0
    %v1747 = vadd.f32 %v1745, %v1746
    %1748 = vadd.xlane.f32.xlu0 %v1747
    %v1749 = vpop.xlane.xlu0 %1748
    %v1750 = vadd.f32 %v1749, %v1502
    %vm1751 = vcmask 83024
    %1752 = vst.msk [vmem:[#allocation2] sm:$0x3] %vm1751, %v1750
    %v1753 = vsel %vm1664, %v1659, 0.0
    %v1754 = vsel %vm1664, %v1660, 0.0
    %v1755 = vadd.f32 %v1753, %v1754
    %1756 = vadd.xlane.f32.xlu0 %v1755
    %v1757 = vpop.xlane.xlu0 %1756
    %v1758 = vadd.f32 %v1757, %v1502
    %vm1759 = vcmask 91224
    %1760 = vst.msk [vmem:[#allocation2] sm:$0x3] %vm1759, %v1758
    %v1761 = vsel %vm1664, %v1661, 0.0
    %v1762 = vsel %vm1664, %v1662, 0.0
    %v1763 = vadd.f32 %v1761, %v1762
    %1764 = vadd.xlane.f32.xlu0 %v1763
    %v1765 = vpop.xlane.xlu0 %1764
    %v1766 = vadd.f32 %v1765, %v1502
    %vm1767 = vcmask 99424
    %1768 = vst.msk [vmem:[#allocation2] sm:$0x3] %vm1767, %v1766
    // Predicated region
    $region18: #{biovil_v2_forward.1} parent=1 // pred_check
      _
    $region19: #{biovil_v2_forward.1} parent=1 // pred_check_branch
      %1770 = sbr.rel (0) target = $region21
    $region20: #{biovil_v2_forward.1} parent=1 // pred_region
      %s1772 = ssub.s32 32, 32
      %1773 = vsyncadd [#allocation3], %s1772
      %s1775 = sshll.u32 [#allocation2], 4
      %s1776 = int_to_ptr.vmem [resolvable:$true] %s1775
      %1778 = dma.vmem_to_hbm [thread:$0]  %s1776, 32, %s4, [#allocation3]
    $region21: #{biovil_v2_forward.1} parent=1 // pred_fallthru
      _
    // Predicated region
    $region22: #{biovil_v2_forward.1} parent=1 // pred_check
      _
    $region23: #{biovil_v2_forward.1} parent=1 // pred_check_branch
      %1780 = sbr.rel (0) target = $region25
    $region24: #{biovil_v2_forward.1} parent=1 // pred_region
      %1781 = dma.done [#allocation3], 32
    $region25: #{biovil_v2_forward.1} parent=1 // pred_fallthru
      _
    %1782 = vsyncpa [#allocation3], 1

</llo_original>
